<compile_context>
chip_gen: v5e
topology: v5e:2x2
jax: 0.10.0
libtpu: 0.0.40
codegen_flags: <defaults>
</compile_context>

<pallas_src>
import functools

import jax
import jax.numpy as jnp
from jax.experimental import pallas as pl
from jax.experimental.pallas import tpu as pltpu

LN_EPS = 1e-5   # nn.LayerNorm default eps


# ----------------------------------------------------------------------------- kernel
def _cube_embed_kernel(x_ref, w_ref, bias_ref, gamma_ref, beta_ref, pe_ref,
                       out_ref, *, seg):
    """One program = (batch sample b, output time step t, spatial row tile).

    x_ref    : (seg, HW_TILE, PPC) bf16  -- cube patches of this (b, t, tile)
    w_ref    : (seg, PPC, D)       bf16  -- Conv3d weight, VMEM resident
    bias_ref : (1, D) f32 ; gamma_ref / beta_ref : (1, D) f32
    pe_ref   : (HW_TILE, D) f32          -- positional-encoding rows for (t, tile)
    out_ref  : (HW_TILE, D) bf16
    """
    # Conv3d (kernel == stride) == sum over kt of (HW_TILE, PPC) @ (PPC, D) MXU
    # matmuls; bf16 operands, f32 accumulation.  seg <= 4, statically unrolled.
    acc = jnp.dot(x_ref[0], w_ref[0], preferred_element_type=jnp.float32)
    for kt in range(1, seg):
        acc = acc + jnp.dot(x_ref[kt], w_ref[kt],
                            preferred_element_type=jnp.float32)
    y = acc + bias_ref[...]                                   # Conv3d bias

    # LayerNorm over D (two-pass variance for stability), affine + PE fused:
    #   out = (y - mean) * (gamma * rsqrt(var + eps)) + (beta + pe)
    mean = jnp.mean(y, axis=-1, keepdims=True)
    c = y - mean
    var = jnp.mean(c * c, axis=-1, keepdims=True)
    scale = gamma_ref[...] * jax.lax.rsqrt(var + LN_EPS)      # broadcast -> (HW_TILE, D)
    out_ref[...] = (c * scale + (beta_ref[...] + pe_ref[...])).astype(out_ref.dtype)


# ----------------------------------------------------------------------------- wrapper
def _pick_hw_tile(hw, max_tile=512):
    """Largest spatial row tile <= max_tile that divides hw (multiple of 8 when tiled)."""
    if hw <= max_tile:
        return hw
    t = max_tile - (max_tile % 8)
    while t >= 8:
        if hw % t == 0:
            return t
        t -= 8
    return hw


def multi_scale_cube_embed_forward(params, x, gates, cfg):
    """Forward of MultiScaleCubeEmbed (eval mode, dense dispatch).

    x     : (B, seq_len, H_img, W_img, C)  channels-last ('b t h w c')
    gates : (B, E) -- all entries assumed > 0 (dense dispatch): routing only.
    Returns: list of per-expert embeddings, each (B, t_out_e, H*W, D) in bf16.
    """
    del gates  # dense dispatch: routing only, no numeric effect
    B, T, Hi, Wi, C = x.shape
    P = cfg["patch_size"]
    D = cfg["embed_dim"]
    segs = tuple(cfg["segment_sizes"])
    H, W = Hi // P, Wi // P
    HW = H * W
    PPC = P * P * C
    pe_full = params["pos_emb"].astype(jnp.float32)           # (seq_len+1, HW, D)

    # ---- shared repack, done ONCE for all experts (feedback items 1 & 2) -----
    # Replicate-pad the time axis far enough for every expert; all padded frames
    # are copies of the last real frame, exactly matching per-expert F.pad(...,
    # mode='replicate') with pad_t = seg - T % seg.
    pads = [seg - T % seg for seg in segs]                     # == seg when divisible
    T_pad = T + max(pads)
    last = jnp.broadcast_to(x[:, T - 1:T], (B, T_pad - T, Hi, Wi, C))
    x_pad = jnp.concatenate([x, last], axis=1)
    # (b,t,h,kh,w,kw,c) -> (b,t,h,w,kh,kw,c) -> (B, T_pad, HW, P*P*C), bf16
    xr = x_pad.reshape(B, T_pad, H, P, W, P, C)
    xr = jnp.transpose(xr, (0, 1, 2, 4, 3, 5, 6))
    x_cubes = xr.reshape(B, T_pad, HW, PPC).astype(jnp.bfloat16)

    hw_tile = _pick_hw_tile(HW)
    n_hw = HW // hw_tile

    outs = []
    for e, (seg, pad_t) in enumerate(zip(segs, pads)):
        t_out = (T + pad_t) // seg
        K = seg * PPC

        # Conv3d weight (D, C, kt, kh, kw) -> (kt, (kh kw c), D), matching the
        # PPC ordering of x_cubes.
        w = params["proj_w"][e]
        w_kt = (jnp.transpose(w, (2, 3, 4, 1, 0))
                .reshape(seg, PPC, D).astype(jnp.bfloat16))
        bias = params["proj_b"][e].reshape(1, D).astype(jnp.float32)
        gamma = params["ln_gamma"][e].reshape(1, D).astype(jnp.float32)
        beta = params["ln_beta"][e].reshape(1, D).astype(jnp.float32)

        # Explicit VMEM budget (double-buffered x / PE / out blocks + resident
        # weight + small vectors), clamped well under v7x's scoped limit.
        blk_bytes = (2 * seg * hw_tile * PPC * 2      # x blocks, bf16, x2 buffers
                     + 2 * hw_tile * D * 4            # PE blocks, f32
                     + 2 * hw_tile * D * 2            # out blocks, bf16
                     + seg * PPC * D * 2              # resident weight
                     + 3 * D * 4)                     # bias / gamma / beta
        vmem_limit = int(min(max(4 * blk_bytes, 8 * 1024 * 1024), 64 * 1024 * 1024))

        cost = pl.CostEstimate(
            flops=2 * B * t_out * HW * K * D,
            transcendentals=B * t_out * HW,
            bytes_accessed=(B * t_out * seg * HW * PPC * 2     # patches read (bf16)
                            + seg * PPC * D * 2                # weight
                            + B * t_out * HW * D * 4           # PE read (f32)
                            + B * t_out * HW * D * 2))         # output write (bf16)

        y = pl.pallas_call(
            functools.partial(_cube_embed_kernel, seg=seg),
            grid=(B, t_out, n_hw),
            in_specs=[
                # cube patches: direct slab of the shared tensor (no per-expert
                # im2col materialization); leading batch dim squeezed.
                pl.BlockSpec((None, seg, hw_tile, PPC), lambda b, t, h: (b, t, h, 0)),
                pl.BlockSpec((seg, PPC, D), lambda b, t, h: (0, 0, 0)),   # weight (resident)
                pl.BlockSpec((1, D), lambda b, t, h: (0, 0)),             # conv bias
                pl.BlockSpec((1, D), lambda b, t, h: (0, 0)),             # LN gamma
                pl.BlockSpec((1, D), lambda b, t, h: (0, 0)),             # LN beta
                pl.BlockSpec((None, hw_tile, D), lambda b, t, h: (t, h, 0)),  # pos. enc.
            ],
            out_specs=pl.BlockSpec((None, None, hw_tile, D),
                                   lambda b, t, h: (b, t, h, 0)),
            out_shape=jax.ShapeDtypeStruct((B, t_out, HW, D), jnp.bfloat16),
            compiler_params=pltpu.CompilerParams(
                dimension_semantics=("parallel", "parallel", "parallel"),
                vmem_limit_bytes=vmem_limit),
            cost_estimate=cost,
        )(x_cubes, w_kt, bias, gamma, beta, pe_full)

        outs.append(y)
    return outs


# ----------------------------------------------------------------------------- reference
def _reference_forward(params, x, cfg):
    """Independent pure-JAX reference (f32, lax.conv_general_dilated)."""
    B, T, Hi, Wi, C = x.shape
    P = cfg["patch_size"]
    D = cfg["embed_dim"]
    H, W = Hi // P, Wi // P
    HW = H * W
    pe_full = params["pos_emb"]
    refs = []
    for e, seg in enumerate(cfg["segment_sizes"]):
        pad_t = seg - T % seg
        x_pad = jnp.concatenate([x, jnp.repeat(x[:, -1:], pad_t, axis=1)], axis=1)
        lhs = jnp.transpose(x_pad, (0, 4, 1, 2, 3))            # (B, C, T_pad, Hi, Wi)
        y = jax.lax.conv_general_dilated(
            lhs, params["proj_w"][e], window_strides=(seg, P, P), padding="VALID",
            dimension_numbers=("NCDHW", "OIDHW", "NCDHW"),
            precision=jax.lax.Precision.HIGHEST)
        y = y + params["proj_b"][e][None, :, None, None, None]
        y = jnp.transpose(y, (0, 2, 3, 4, 1)).reshape(B, -1, HW, D)  # b t (h w) d
        mean = jnp.mean(y, axis=-1, keepdims=True)
        var = jnp.mean(jnp.square(y - mean), axis=-1, keepdims=True)
        y = (y - mean) / jnp.sqrt(var + LN_EPS)
        y = y * params["ln_gamma"][e] + params["ln_beta"][e]
        y = y + pe_full[: y.shape[1]][None]
        refs.append(y)
    return refs


def _sincos_table(n_pos, dim):
    pos = jnp.arange(n_pos, dtype=jnp.float32)[:, None]
    idx = jnp.arange(dim, dtype=jnp.float32)[None, :]
    inv_freq = jnp.power(10000.0, -(2.0 * jnp.floor(idx / 2.0)) / dim)
    ang = pos * inv_freq
    return jnp.where(idx % 2.0 == 0.0, jnp.sin(ang), jnp.cos(ang))


def build_positional_embedding_2d(d_model, t_len, s_len):
    d_half = d_model // 2
    pe_t = _sincos_table(t_len, d_half)                        # (t_len, d/2)
    pe_s = _sincos_table(s_len, d_model - d_half)              # (s_len, d/2)
    pe = jnp.concatenate([
        jnp.broadcast_to(pe_t[:, None, :], (t_len, s_len, d_half)),
        jnp.broadcast_to(pe_s[None, :, :], (t_len, s_len, d_model - d_half)),
    ], axis=-1)
    return pe.astype(jnp.float32)                              # (t_len, s_len, d_model)


# ----------------------------------------------------------------------------- demo
if __name__ == "__main__":
    B = 2
    seq_len = 8
    img_size = (16, 16)
    patch_size = 4
    in_chans = 4
    embed_dim = 128                                            # lane-dense feature dim
    segment_sizes = (1, 2, 4)
    stride_scale = 1                                           # stride_s = patch, padding_s = 0

    H = img_size[0] // patch_size
    W = img_size[1] // patch_size
    E = len(segment_sizes)

    key = jax.random.PRNGKey(0)
    k_params, k_x, k_g = jax.random.split(key, 3)

    # deterministic synthetic parameters (shapes from CubeEmbed / MultiScaleCubeEmbed)
    pkeys = jax.random.split(k_params, 2 * E)
    proj_w, proj_b, ln_gamma, ln_beta = [], [], [], []
    for i, seg in enumerate(segment_sizes):
        proj_w.append(0.05 * jax.random.normal(
            pkeys[2 * i], (embed_dim, in_chans, seg, patch_size, patch_size), jnp.float32))
        proj_b.append(0.05 * jax.random.normal(pkeys[2 * i + 1], (embed_dim,), jnp.float32))
        ln_gamma.append(jnp.ones((embed_dim,), jnp.float32))
        ln_beta.append(jnp.zeros((embed_dim,), jnp.float32))
    params = dict(
        proj_w=proj_w, proj_b=proj_b, ln_gamma=ln_gamma, ln_beta=ln_beta,
        pos_emb=build_positional_embedding_2d(embed_dim, seq_len + 1, H * W),
    )

    # inputs: x 'b t h w c', dense dispatch gates (all > 0, rows sum to 1)
    x = jax.random.normal(k_x, (B, seq_len, img_size[0], img_size[1], in_chans), jnp.float32)
    gates = jax.nn.softmax(jax.random.normal(k_g, (B, E), jnp.float32), axis=-1)
    assert bool(jnp.all(gates > 0))                            # dense-dispatch precondition

    cfg = dict(patch_size=patch_size, embed_dim=embed_dim, segment_sizes=segment_sizes)

    fwd = jax.jit(lambda p, xx, g: multi_scale_cube_embed_forward(p, xx, g, cfg))
    outs = fwd(params, x, gates)
    outs = jax.block_until_ready(outs)

    refs = _reference_forward(params, x, cfg)
    for e, seg in enumerate(segment_sizes):
        pad_t = seg - seq_len % seg
        t_out = (seq_len + pad_t) // seg
        expected = (B, t_out, H * W, embed_dim)
        assert outs[e].shape == expected, (outs[e].shape, expected)
        assert outs[e].dtype == jnp.bfloat16
        o = outs[e].astype(jnp.float32)
        assert bool(jnp.all(jnp.isfinite(o)))
        err = jnp.abs(o - refs[e])
        max_err = float(jnp.max(err))
        rms_err = float(jnp.sqrt(jnp.mean(err * err)))
        assert max_err < 8e-2, ("expert", e, "max_err", max_err)
        assert rms_err < 2e-2, ("expert", e, "rms_err", rms_err)

    print("KERNEL_OK")
</pallas_src>

<mosaic_0001>
module attributes {stable_mosaic.version = 11 : i64} {
  func.func @_cube_embed_kernel(%arg0: i32, %arg1: i32, %arg2: i32, %arg3: memref<1x4x16x64xbf16, #tpu.memory_space<vmem>>, %arg4: memref<4x64x128xbf16, #tpu.memory_space<vmem>>, %arg5: memref<1x128xf32, #tpu.memory_space<vmem>>, %arg6: memref<1x128xf32, #tpu.memory_space<vmem>>, %arg7: memref<1x128xf32, #tpu.memory_space<vmem>>, %arg8: memref<1x16x128xf32, #tpu.memory_space<vmem>>, %arg9: memref<1x1x16x128xbf16, #tpu.memory_space<vmem>>) attributes {dimension_semantics = [#tpu.dimension_semantics<parallel>, #tpu.dimension_semantics<parallel>, #tpu.dimension_semantics<parallel>], iteration_bounds = array<i64: 2, 3, 1>, scalar_prefetch = 0 : i64, scratch_operands = 0 : i64, tpu.core_type = #tpu.core_type<tc>, window_params = [{transform_indices = @transform_0, window_bounds = array<i64: 1, 4, 16, 64>}, {pipeline_mode = #tpu.pipeline_mode<synchronous>, transform_indices = @transform_1, window_bounds = array<i64: 4, 64, 128>}, {pipeline_mode = #tpu.pipeline_mode<synchronous>, transform_indices = @transform_2, window_bounds = array<i64: 1, 128>}, {pipeline_mode = #tpu.pipeline_mode<synchronous>, transform_indices = @transform_3, window_bounds = array<i64: 1, 128>}, {pipeline_mode = #tpu.pipeline_mode<synchronous>, transform_indices = @transform_4, window_bounds = array<i64: 1, 128>}, {transform_indices = @transform_5, window_bounds = array<i64: 1, 16, 128>}, {transform_indices = @transform_6, window_bounds = array<i64: 1, 1, 16, 128>}]} {
    %c0 = arith.constant 0 : index
    %c0_0 = arith.constant 0 : index
    %c0_1 = arith.constant 0 : index
    %c0_2 = arith.constant 0 : index
    %0 = vector.load %arg3[%c0, %c0_0, %c0_1, %c0_2] : memref<1x4x16x64xbf16, #tpu.memory_space<vmem>>, vector<1x1x16x64xbf16>
    %1 = vector.shape_cast %0 : vector<1x1x16x64xbf16> to vector<16x64xbf16>
    %c0_3 = arith.constant 0 : index
    %c0_4 = arith.constant 0 : index
    %c0_5 = arith.constant 0 : index
    %2 = vector.load %arg4[%c0_3, %c0_4, %c0_5] : memref<4x64x128xbf16, #tpu.memory_space<vmem>>, vector<1x64x128xbf16>
    %3 = vector.shape_cast %2 : vector<1x64x128xbf16> to vector<64x128xbf16>
    %cst = arith.constant dense<0.000000e+00> : vector<16x128xf32>
    %4 = tpu.matmul %1, %3, %cst {dimension_numbers = #tpu.dot_dimension_numbers<[1], [0], [0], [1], [0, 0, 1, 1], [], []>} : vector<16x64xbf16>, vector<64x128xbf16>, vector<16x128xf32> -> vector<16x128xf32>
    %c0_6 = arith.constant 0 : index
    %c1 = arith.constant 1 : index
    %c0_7 = arith.constant 0 : index
    %c0_8 = arith.constant 0 : index
    %5 = vector.load %arg3[%c0_6, %c1, %c0_7, %c0_8] : memref<1x4x16x64xbf16, #tpu.memory_space<vmem>>, vector<1x1x16x64xbf16>
    %6 = vector.shape_cast %5 : vector<1x1x16x64xbf16> to vector<16x64xbf16>
    %c1_9 = arith.constant 1 : index
    %c0_10 = arith.constant 0 : index
    %c0_11 = arith.constant 0 : index
    %7 = vector.load %arg4[%c1_9, %c0_10, %c0_11] : memref<4x64x128xbf16, #tpu.memory_space<vmem>>, vector<1x64x128xbf16>
    %8 = vector.shape_cast %7 : vector<1x64x128xbf16> to vector<64x128xbf16>
    %cst_12 = arith.constant dense<0.000000e+00> : vector<16x128xf32>
    %9 = tpu.matmul %6, %8, %cst_12 {dimension_numbers = #tpu.dot_dimension_numbers<[1], [0], [0], [1], [0, 0, 1, 1], [], []>} : vector<16x64xbf16>, vector<64x128xbf16>, vector<16x128xf32> -> vector<16x128xf32>
    %10 = arith.addf %4, %9 : vector<16x128xf32>
    %c0_13 = arith.constant 0 : index
    %c2 = arith.constant 2 : index
    %c0_14 = arith.constant 0 : index
    %c0_15 = arith.constant 0 : index
    %11 = vector.load %arg3[%c0_13, %c2, %c0_14, %c0_15] : memref<1x4x16x64xbf16, #tpu.memory_space<vmem>>, vector<1x1x16x64xbf16>
    %12 = vector.shape_cast %11 : vector<1x1x16x64xbf16> to vector<16x64xbf16>
    %c2_16 = arith.constant 2 : index
    %c0_17 = arith.constant 0 : index
    %c0_18 = arith.constant 0 : index
    %13 = vector.load %arg4[%c2_16, %c0_17, %c0_18] : memref<4x64x128xbf16, #tpu.memory_space<vmem>>, vector<1x64x128xbf16>
    %14 = vector.shape_cast %13 : vector<1x64x128xbf16> to vector<64x128xbf16>
    %cst_19 = arith.constant dense<0.000000e+00> : vector<16x128xf32>
    %15 = tpu.matmul %12, %14, %cst_19 {dimension_numbers = #tpu.dot_dimension_numbers<[1], [0], [0], [1], [0, 0, 1, 1], [], []>} : vector<16x64xbf16>, vector<64x128xbf16>, vector<16x128xf32> -> vector<16x128xf32>
    %16 = arith.addf %10, %15 : vector<16x128xf32>
    %c0_20 = arith.constant 0 : index
    %c3 = arith.constant 3 : index
    %c0_21 = arith.constant 0 : index
    %c0_22 = arith.constant 0 : index
    %17 = vector.load %arg3[%c0_20, %c3, %c0_21, %c0_22] : memref<1x4x16x64xbf16, #tpu.memory_space<vmem>>, vector<1x1x16x64xbf16>
    %18 = vector.shape_cast %17 : vector<1x1x16x64xbf16> to vector<16x64xbf16>
    %c3_23 = arith.constant 3 : index
    %c0_24 = arith.constant 0 : index
    %c0_25 = arith.constant 0 : index
    %19 = vector.load %arg4[%c3_23, %c0_24, %c0_25] : memref<4x64x128xbf16, #tpu.memory_space<vmem>>, vector<1x64x128xbf16>
    %20 = vector.shape_cast %19 : vector<1x64x128xbf16> to vector<64x128xbf16>
    %cst_26 = arith.constant dense<0.000000e+00> : vector<16x128xf32>
    %21 = tpu.matmul %18, %20, %cst_26 {dimension_numbers = #tpu.dot_dimension_numbers<[1], [0], [0], [1], [0, 0, 1, 1], [], []>} : vector<16x64xbf16>, vector<64x128xbf16>, vector<16x128xf32> -> vector<16x128xf32>
    %22 = arith.addf %16, %21 : vector<16x128xf32>
    %c0_27 = arith.constant 0 : index
    %c0_28 = arith.constant 0 : index
    %23 = vector.load %arg5[%c0_27, %c0_28] : memref<1x128xf32, #tpu.memory_space<vmem>>, vector<1x128xf32>
    %24 = vector.broadcast %23 : vector<1x128xf32> to vector<16x128xf32>
    %25 = arith.addf %22, %24 : vector<16x128xf32>
    %cst_29 = arith.constant dense<0.000000e+00> : vector<16xf32>
    %26 = vector.multi_reduction <add>, %25, %cst_29 [1] : vector<16x128xf32> to vector<16xf32>
    %27 = vector.shape_cast %26 : vector<16xf32> to vector<16x1xf32>
    %cst_30 = arith.constant 1.280000e+02 : f32
    %28 = vector.broadcast %cst_30 : f32 to vector<16x1xf32>
    %29 = arith.divf %27, %28 : vector<16x1xf32>
    %30 = vector.broadcast %29 : vector<16x1xf32> to vector<16x128xf32>
    %31 = arith.subf %25, %30 : vector<16x128xf32>
    %32 = arith.mulf %31, %31 : vector<16x128xf32>
    %cst_31 = arith.constant dense<0.000000e+00> : vector<16xf32>
    %33 = vector.multi_reduction <add>, %32, %cst_31 [1] : vector<16x128xf32> to vector<16xf32>
    %34 = vector.shape_cast %33 : vector<16xf32> to vector<16x1xf32>
    %cst_32 = arith.constant 1.280000e+02 : f32
    %35 = vector.broadcast %cst_32 : f32 to vector<16x1xf32>
    %36 = arith.divf %34, %35 : vector<16x1xf32>
    %c0_33 = arith.constant 0 : index
    %c0_34 = arith.constant 0 : index
    %37 = vector.load %arg6[%c0_33, %c0_34] : memref<1x128xf32, #tpu.memory_space<vmem>>, vector<1x128xf32>
    %cst_35 = arith.constant 9.99999974E-6 : f32
    %38 = vector.broadcast %cst_35 : f32 to vector<16x1xf32>
    %39 = arith.addf %36, %38 : vector<16x1xf32>
    %40 = math.rsqrt %39 : vector<16x1xf32>
    %41 = vector.broadcast %37 : vector<1x128xf32> to vector<16x128xf32>
    %42 = vector.broadcast %40 : vector<16x1xf32> to vector<16x128xf32>
    %43 = arith.mulf %41, %42 : vector<16x128xf32>
    %44 = arith.mulf %31, %43 : vector<16x128xf32>
    %c0_36 = arith.constant 0 : index
    %c0_37 = arith.constant 0 : index
    %45 = vector.load %arg7[%c0_36, %c0_37] : memref<1x128xf32, #tpu.memory_space<vmem>>, vector<1x128xf32>
    %c0_38 = arith.constant 0 : index
    %c0_39 = arith.constant 0 : index
    %c0_40 = arith.constant 0 : index
    %46 = vector.load %arg8[%c0_38, %c0_39, %c0_40] : memref<1x16x128xf32, #tpu.memory_space<vmem>>, vector<1x16x128xf32>
    %47 = vector.shape_cast %46 : vector<1x16x128xf32> to vector<16x128xf32>
    %48 = vector.broadcast %45 : vector<1x128xf32> to vector<16x128xf32>
    %49 = arith.addf %48, %47 : vector<16x128xf32>
    %50 = arith.addf %44, %49 : vector<16x128xf32>
    %51 = arith.truncf %50 : vector<16x128xf32> to vector<16x128xbf16>
    %c0_41 = arith.constant 0 : index
    %c0_42 = arith.constant 0 : index
    %c0_43 = arith.constant 0 : index
    %c0_44 = arith.constant 0 : index
    %52 = vector.load %arg9[%c0_41, %c0_42, %c0_43, %c0_44] : memref<1x1x16x128xbf16, #tpu.memory_space<vmem>>, vector<1x1x16x128xbf16>
    %53 = vector.shape_cast %52 : vector<1x1x16x128xbf16> to vector<16x128xbf16>
    %54 = vector.shape_cast %51 : vector<16x128xbf16> to vector<1x1x16x128xbf16>
    tpu.vector_store %arg9[%c0_41, %c0_42, %c0_43, %c0_44], %54 {strides = array<i32>} : memref<1x1x16x128xbf16, #tpu.memory_space<vmem>>, vector<1x1x16x128xbf16>,
    return
  }
  func.func @transform_0(%arg0: i32, %arg1: i32, %arg2: i32) -> (i32, i32, i32, i32) {
    %c0_i32 = arith.constant 0 : i32
    %c0_i32_0 = arith.constant 0 : i32
    return %arg0, %arg1, %arg2, %c0_i32 : i32, i32, i32, i32
  }
  func.func @transform_1(%arg0: i32, %arg1: i32, %arg2: i32) -> (i32, i32, i32) {
    %c0_i32 = arith.constant 0 : i32
    %c0_i32_0 = arith.constant 0 : i32
    %c0_i32_1 = arith.constant 0 : i32
    %c0_i32_2 = arith.constant 0 : i32
    return %c0_i32, %c0_i32_0, %c0_i32_1 : i32, i32, i32
  }
  func.func @transform_2(%arg0: i32, %arg1: i32, %arg2: i32) -> (i32, i32) {
    %c0_i32 = arith.constant 0 : i32
    %c0_i32_0 = arith.constant 0 : i32
    %c0_i32_1 = arith.constant 0 : i32
    return %c0_i32, %c0_i32_0 : i32, i32
  }
  func.func @transform_3(%arg0: i32, %arg1: i32, %arg2: i32) -> (i32, i32) {
    %c0_i32 = arith.constant 0 : i32
    %c0_i32_0 = arith.constant 0 : i32
    %c0_i32_1 = arith.constant 0 : i32
    return %c0_i32, %c0_i32_0 : i32, i32
  }
  func.func @transform_4(%arg0: i32, %arg1: i32, %arg2: i32) -> (i32, i32) {
    %c0_i32 = arith.constant 0 : i32
    %c0_i32_0 = arith.constant 0 : i32
    %c0_i32_1 = arith.constant 0 : i32
    return %c0_i32, %c0_i32_0 : i32, i32
  }
  func.func @transform_5(%arg0: i32, %arg1: i32, %arg2: i32) -> (i32, i32, i32) {
    %c0_i32 = arith.constant 0 : i32
    %c0_i32_0 = arith.constant 0 : i32
    return %arg1, %arg2, %c0_i32 : i32, i32, i32
  }
  func.func @transform_6(%arg0: i32, %arg1: i32, %arg2: i32) -> (i32, i32, i32, i32) {
    %c0_i32 = arith.constant 0 : i32
    %c0_i32_0 = arith.constant 0 : i32
    return %arg0, %arg1, %arg2, %c0_i32 : i32, i32, i32, i32
  }
}

module attributes {stable_mosaic.version = 11 : i64} {
  func.func @_cube_embed_kernel(%arg0: i32, %arg1: i32, %arg2: i32, %arg3: memref<1x1x16x64xbf16, #tpu.memory_space<vmem>>, %arg4: memref<1x64x128xbf16, #tpu.memory_space<vmem>>, %arg5: memref<1x128xf32, #tpu.memory_space<vmem>>, %arg6: memref<1x128xf32, #tpu.memory_space<vmem>>, %arg7: memref<1x128xf32, #tpu.memory_space<vmem>>, %arg8: memref<1x16x128xf32, #tpu.memory_space<vmem>>, %arg9: memref<1x1x16x128xbf16, #tpu.memory_space<vmem>>) attributes {dimension_semantics = [#tpu.dimension_semantics<parallel>, #tpu.dimension_semantics<parallel>, #tpu.dimension_semantics<parallel>], iteration_bounds = array<i64: 2, 9, 1>, scalar_prefetch = 0 : i64, scratch_operands = 0 : i64, tpu.core_type = #tpu.core_type<tc>, window_params = [{transform_indices = @transform_0, window_bounds = array<i64: 1, 1, 16, 64>}, {pipeline_mode = #tpu.pipeline_mode<synchronous>, transform_indices = @transform_1, window_bounds = array<i64: 1, 64, 128>}, {pipeline_mode = #tpu.pipeline_mode<synchronous>, transform_indices = @transform_2, window_bounds = array<i64: 1, 128>}, {pipeline_mode = #tpu.pipeline_mode<synchronous>, transform_indices = @transform_3, window_bounds = array<i64: 1, 128>}, {pipeline_mode = #tpu.pipeline_mode<synchronous>, transform_indices = @transform_4, window_bounds = array<i64: 1, 128>}, {transform_indices = @transform_5, window_bounds = array<i64: 1, 16, 128>}, {transform_indices = @transform_6, window_bounds = array<i64: 1, 1, 16, 128>}]} {
    %c0 = arith.constant 0 : index
    %c0_0 = arith.constant 0 : index
    %c0_1 = arith.constant 0 : index
    %c0_2 = arith.constant 0 : index
    %0 = vector.load %arg3[%c0, %c0_0, %c0_1, %c0_2] : memref<1x1x16x64xbf16, #tpu.memory_space<vmem>>, vector<1x1x16x64xbf16>
    %1 = vector.shape_cast %0 : vector<1x1x16x64xbf16> to vector<16x64xbf16>
    %c0_3 = arith.constant 0 : index
    %c0_4 = arith.constant 0 : index
    %c0_5 = arith.constant 0 : index
    %2 = vector.load %arg4[%c0_3, %c0_4, %c0_5] : memref<1x64x128xbf16, #tpu.memory_space<vmem>>, vector<1x64x128xbf16>
    %3 = vector.shape_cast %2 : vector<1x64x128xbf16> to vector<64x128xbf16>
    %cst = arith.constant dense<0.000000e+00> : vector<16x128xf32>
    %4 = tpu.matmul %1, %3, %cst {dimension_numbers = #tpu.dot_dimension_numbers<[1], [0], [0], [1], [0, 0, 1, 1], [], []>} : vector<16x64xbf16>, vector<64x128xbf16>, vector<16x128xf32> -> vector<16x128xf32>
    %c0_6 = arith.constant 0 : index
    %c0_7 = arith.constant 0 : index
    %5 = vector.load %arg5[%c0_6, %c0_7] : memref<1x128xf32, #tpu.memory_space<vmem>>, vector<1x128xf32>
    %6 = vector.broadcast %5 : vector<1x128xf32> to vector<16x128xf32>
    %7 = arith.addf %4, %6 : vector<16x128xf32>
    %cst_8 = arith.constant dense<0.000000e+00> : vector<16xf32>
    %8 = vector.multi_reduction <add>, %7, %cst_8 [1] : vector<16x128xf32> to vector<16xf32>
    %9 = vector.shape_cast %8 : vector<16xf32> to vector<16x1xf32>
    %cst_9 = arith.constant 1.280000e+02 : f32
    %10 = vector.broadcast %cst_9 : f32 to vector<16x1xf32>
    %11 = arith.divf %9, %10 : vector<16x1xf32>
    %12 = vector.broadcast %11 : vector<16x1xf32> to vector<16x128xf32>
    %13 = arith.subf %7, %12 : vector<16x128xf32>
    %14 = arith.mulf %13, %13 : vector<16x128xf32>
    %cst_10 = arith.constant dense<0.000000e+00> : vector<16xf32>
    %15 = vector.multi_reduction <add>, %14, %cst_10 [1] : vector<16x128xf32> to vector<16xf32>
    %16 = vector.shape_cast %15 : vector<16xf32> to vector<16x1xf32>
    %cst_11 = arith.constant 1.280000e+02 : f32
    %17 = vector.broadcast %cst_11 : f32 to vector<16x1xf32>
    %18 = arith.divf %16, %17 : vector<16x1xf32>
    %c0_12 = arith.constant 0 : index
    %c0_13 = arith.constant 0 : index
    %19 = vector.load %arg6[%c0_12, %c0_13] : memref<1x128xf32, #tpu.memory_space<vmem>>, vector<1x128xf32>
    %cst_14 = arith.constant 9.99999974E-6 : f32
    %20 = vector.broadcast %cst_14 : f32 to vector<16x1xf32>
    %21 = arith.addf %18, %20 : vector<16x1xf32>
    %22 = math.rsqrt %21 : vector<16x1xf32>
    %23 = vector.broadcast %19 : vector<1x128xf32> to vector<16x128xf32>
    %24 = vector.broadcast %22 : vector<16x1xf32> to vector<16x128xf32>
    %25 = arith.mulf %23, %24 : vector<16x128xf32>
    %26 = arith.mulf %13, %25 : vector<16x128xf32>
    %c0_15 = arith.constant 0 : index
    %c0_16 = arith.constant 0 : index
    %27 = vector.load %arg7[%c0_15, %c0_16] : memref<1x128xf32, #tpu.memory_space<vmem>>, vector<1x128xf32>
    %c0_17 = arith.constant 0 : index
    %c0_18 = arith.constant 0 : index
    %c0_19 = arith.constant 0 : index
    %28 = vector.load %arg8[%c0_17, %c0_18, %c0_19] : memref<1x16x128xf32, #tpu.memory_space<vmem>>, vector<1x16x128xf32>
    %29 = vector.shape_cast %28 : vector<1x16x128xf32> to vector<16x128xf32>
    %30 = vector.broadcast %27 : vector<1x128xf32> to vector<16x128xf32>
    %31 = arith.addf %30, %29 : vector<16x128xf32>
    %32 = arith.addf %26, %31 : vector<16x128xf32>
    %33 = arith.truncf %32 : vector<16x128xf32> to vector<16x128xbf16>
    %c0_20 = arith.constant 0 : index
    %c0_21 = arith.constant 0 : index
    %c0_22 = arith.constant 0 : index
    %c0_23 = arith.constant 0 : index
    %34 = vector.load %arg9[%c0_20, %c0_21, %c0_22, %c0_23] : memref<1x1x16x128xbf16, #tpu.memory_space<vmem>>, vector<1x1x16x128xbf16>
    %35 = vector.shape_cast %34 : vector<1x1x16x128xbf16> to vector<16x128xbf16>
    %36 = vector.shape_cast %33 : vector<16x128xbf16> to vector<1x1x16x128xbf16>
    tpu.vector_store %arg9[%c0_20, %c0_21, %c0_22, %c0_23], %36 {strides = array<i32>} : memref<1x1x16x128xbf16, #tpu.memory_space<vmem>>, vector<1x1x16x128xbf16>,
    return
  }
  func.func @transform_0(%arg0: i32, %arg1: i32, %arg2: i32) -> (i32, i32, i32, i32) {
    %c0_i32 = arith.constant 0 : i32
    %c0_i32_0 = arith.constant 0 : i32
    return %arg0, %arg1, %arg2, %c0_i32 : i32, i32, i32, i32
  }
  func.func @transform_1(%arg0: i32, %arg1: i32, %arg2: i32) -> (i32, i32, i32) {
    %c0_i32 = arith.constant 0 : i32
    %c0_i32_0 = arith.constant 0 : i32
    %c0_i32_1 = arith.constant 0 : i32
    %c0_i32_2 = arith.constant 0 : i32
    return %c0_i32, %c0_i32_0, %c0_i32_1 : i32, i32, i32
  }
  func.func @transform_2(%arg0: i32, %arg1: i32, %arg2: i32) -> (i32, i32) {
    %c0_i32 = arith.constant 0 : i32
    %c0_i32_0 = arith.constant 0 : i32
    %c0_i32_1 = arith.constant 0 : i32
    return %c0_i32, %c0_i32_0 : i32, i32
  }
  func.func @transform_3(%arg0: i32, %arg1: i32, %arg2: i32) -> (i32, i32) {
    %c0_i32 = arith.constant 0 : i32
    %c0_i32_0 = arith.constant 0 : i32
    %c0_i32_1 = arith.constant 0 : i32
    return %c0_i32, %c0_i32_0 : i32, i32
  }
  func.func @transform_4(%arg0: i32, %arg1: i32, %arg2: i32) -> (i32, i32) {
    %c0_i32 = arith.constant 0 : i32
    %c0_i32_0 = arith.constant 0 : i32
    %c0_i32_1 = arith.constant 0 : i32
    return %c0_i32, %c0_i32_0 : i32, i32
  }
  func.func @transform_5(%arg0: i32, %arg1: i32, %arg2: i32) -> (i32, i32, i32) {
    %c0_i32 = arith.constant 0 : i32
    %c0_i32_0 = arith.constant 0 : i32
    return %arg1, %arg2, %c0_i32 : i32, i32, i32
  }
  func.func @transform_6(%arg0: i32, %arg1: i32, %arg2: i32) -> (i32, i32, i32, i32) {
    %c0_i32 = arith.constant 0 : i32
    %c0_i32_0 = arith.constant 0 : i32
    return %arg0, %arg1, %arg2, %c0_i32 : i32, i32, i32, i32
  }
}

module attributes {stable_mosaic.version = 11 : i64} {
  func.func @_cube_embed_kernel(%arg0: i32, %arg1: i32, %arg2: i32, %arg3: memref<1x2x16x64xbf16, #tpu.memory_space<vmem>>, %arg4: memref<2x64x128xbf16, #tpu.memory_space<vmem>>, %arg5: memref<1x128xf32, #tpu.memory_space<vmem>>, %arg6: memref<1x128xf32, #tpu.memory_space<vmem>>, %arg7: memref<1x128xf32, #tpu.memory_space<vmem>>, %arg8: memref<1x16x128xf32, #tpu.memory_space<vmem>>, %arg9: memref<1x1x16x128xbf16, #tpu.memory_space<vmem>>) attributes {dimension_semantics = [#tpu.dimension_semantics<parallel>, #tpu.dimension_semantics<parallel>, #tpu.dimension_semantics<parallel>], iteration_bounds = array<i64: 2, 5, 1>, scalar_prefetch = 0 : i64, scratch_operands = 0 : i64, tpu.core_type = #tpu.core_type<tc>, window_params = [{transform_indices = @transform_0, window_bounds = array<i64: 1, 2, 16, 64>}, {pipeline_mode = #tpu.pipeline_mode<synchronous>, transform_indices = @transform_1, window_bounds = array<i64: 2, 64, 128>}, {pipeline_mode = #tpu.pipeline_mode<synchronous>, transform_indices = @transform_2, window_bounds = array<i64: 1, 128>}, {pipeline_mode = #tpu.pipeline_mode<synchronous>, transform_indices = @transform_3, window_bounds = array<i64: 1, 128>}, {pipeline_mode = #tpu.pipeline_mode<synchronous>, transform_indices = @transform_4, window_bounds = array<i64: 1, 128>}, {transform_indices = @transform_5, window_bounds = array<i64: 1, 16, 128>}, {transform_indices = @transform_6, window_bounds = array<i64: 1, 1, 16, 128>}]} {
    %c0 = arith.constant 0 : index
    %c0_0 = arith.constant 0 : index
    %c0_1 = arith.constant 0 : index
    %c0_2 = arith.constant 0 : index
    %0 = vector.load %arg3[%c0, %c0_0, %c0_1, %c0_2] : memref<1x2x16x64xbf16, #tpu.memory_space<vmem>>, vector<1x1x16x64xbf16>
    %1 = vector.shape_cast %0 : vector<1x1x16x64xbf16> to vector<16x64xbf16>
    %c0_3 = arith.constant 0 : index
    %c0_4 = arith.constant 0 : index
    %c0_5 = arith.constant 0 : index
    %2 = vector.load %arg4[%c0_3, %c0_4, %c0_5] : memref<2x64x128xbf16, #tpu.memory_space<vmem>>, vector<1x64x128xbf16>
    %3 = vector.shape_cast %2 : vector<1x64x128xbf16> to vector<64x128xbf16>
    %cst = arith.constant dense<0.000000e+00> : vector<16x128xf32>
    %4 = tpu.matmul %1, %3, %cst {dimension_numbers = #tpu.dot_dimension_numbers<[1], [0], [0], [1], [0, 0, 1, 1], [], []>} : vector<16x64xbf16>, vector<64x128xbf16>, vector<16x128xf32> -> vector<16x128xf32>
    %c0_6 = arith.constant 0 : index
    %c1 = arith.constant 1 : index
    %c0_7 = arith.constant 0 : index
    %c0_8 = arith.constant 0 : index
    %5 = vector.load %arg3[%c0_6, %c1, %c0_7, %c0_8] : memref<1x2x16x64xbf16, #tpu.memory_space<vmem>>, vector<1x1x16x64xbf16>
    %6 = vector.shape_cast %5 : vector<1x1x16x64xbf16> to vector<16x64xbf16>
    %c1_9 = arith.constant 1 : index
    %c0_10 = arith.constant 0 : index
    %c0_11 = arith.constant 0 : index
    %7 = vector.load %arg4[%c1_9, %c0_10, %c0_11] : memref<2x64x128xbf16, #tpu.memory_space<vmem>>, vector<1x64x128xbf16>
    %8 = vector.shape_cast %7 : vector<1x64x128xbf16> to vector<64x128xbf16>
    %cst_12 = arith.constant dense<0.000000e+00> : vector<16x128xf32>
    %9 = tpu.matmul %6, %8, %cst_12 {dimension_numbers = #tpu.dot_dimension_numbers<[1], [0], [0], [1], [0, 0, 1, 1], [], []>} : vector<16x64xbf16>, vector<64x128xbf16>, vector<16x128xf32> -> vector<16x128xf32>
    %10 = arith.addf %4, %9 : vector<16x128xf32>
    %c0_13 = arith.constant 0 : index
    %c0_14 = arith.constant 0 : index
    %11 = vector.load %arg5[%c0_13, %c0_14] : memref<1x128xf32, #tpu.memory_space<vmem>>, vector<1x128xf32>
    %12 = vector.broadcast %11 : vector<1x128xf32> to vector<16x128xf32>
    %13 = arith.addf %10, %12 : vector<16x128xf32>
    %cst_15 = arith.constant dense<0.000000e+00> : vector<16xf32>
    %14 = vector.multi_reduction <add>, %13, %cst_15 [1] : vector<16x128xf32> to vector<16xf32>
    %15 = vector.shape_cast %14 : vector<16xf32> to vector<16x1xf32>
    %cst_16 = arith.constant 1.280000e+02 : f32
    %16 = vector.broadcast %cst_16 : f32 to vector<16x1xf32>
    %17 = arith.divf %15, %16 : vector<16x1xf32>
    %18 = vector.broadcast %17 : vector<16x1xf32> to vector<16x128xf32>
    %19 = arith.subf %13, %18 : vector<16x128xf32>
    %20 = arith.mulf %19, %19 : vector<16x128xf32>
    %cst_17 = arith.constant dense<0.000000e+00> : vector<16xf32>
    %21 = vector.multi_reduction <add>, %20, %cst_17 [1] : vector<16x128xf32> to vector<16xf32>
    %22 = vector.shape_cast %21 : vector<16xf32> to vector<16x1xf32>
    %cst_18 = arith.constant 1.280000e+02 : f32
    %23 = vector.broadcast %cst_18 : f32 to vector<16x1xf32>
    %24 = arith.divf %22, %23 : vector<16x1xf32>
    %c0_19 = arith.constant 0 : index
    %c0_20 = arith.constant 0 : index
    %25 = vector.load %arg6[%c0_19, %c0_20] : memref<1x128xf32, #tpu.memory_space<vmem>>, vector<1x128xf32>
    %cst_21 = arith.constant 9.99999974E-6 : f32
    %26 = vector.broadcast %cst_21 : f32 to vector<16x1xf32>
    %27 = arith.addf %24, %26 : vector<16x1xf32>
    %28 = math.rsqrt %27 : vector<16x1xf32>
    %29 = vector.broadcast %25 : vector<1x128xf32> to vector<16x128xf32>
    %30 = vector.broadcast %28 : vector<16x1xf32> to vector<16x128xf32>
    %31 = arith.mulf %29, %30 : vector<16x128xf32>
    %32 = arith.mulf %19, %31 : vector<16x128xf32>
    %c0_22 = arith.constant 0 : index
    %c0_23 = arith.constant 0 : index
    %33 = vector.load %arg7[%c0_22, %c0_23] : memref<1x128xf32, #tpu.memory_space<vmem>>, vector<1x128xf32>
    %c0_24 = arith.constant 0 : index
    %c0_25 = arith.constant 0 : index
    %c0_26 = arith.constant 0 : index
    %34 = vector.load %arg8[%c0_24, %c0_25, %c0_26] : memref<1x16x128xf32, #tpu.memory_space<vmem>>, vector<1x16x128xf32>
    %35 = vector.shape_cast %34 : vector<1x16x128xf32> to vector<16x128xf32>
    %36 = vector.broadcast %33 : vector<1x128xf32> to vector<16x128xf32>
    %37 = arith.addf %36, %35 : vector<16x128xf32>
    %38 = arith.addf %32, %37 : vector<16x128xf32>
    %39 = arith.truncf %38 : vector<16x128xf32> to vector<16x128xbf16>
    %c0_27 = arith.constant 0 : index
    %c0_28 = arith.constant 0 : index
    %c0_29 = arith.constant 0 : index
    %c0_30 = arith.constant 0 : index
    %40 = vector.load %arg9[%c0_27, %c0_28, %c0_29, %c0_30] : memref<1x1x16x128xbf16, #tpu.memory_space<vmem>>, vector<1x1x16x128xbf16>
    %41 = vector.shape_cast %40 : vector<1x1x16x128xbf16> to vector<16x128xbf16>
    %42 = vector.shape_cast %39 : vector<16x128xbf16> to vector<1x1x16x128xbf16>
    tpu.vector_store %arg9[%c0_27, %c0_28, %c0_29, %c0_30], %42 {strides = array<i32>} : memref<1x1x16x128xbf16, #tpu.memory_space<vmem>>, vector<1x1x16x128xbf16>,
    return
  }
  func.func @transform_0(%arg0: i32, %arg1: i32, %arg2: i32) -> (i32, i32, i32, i32) {
    %c0_i32 = arith.constant 0 : i32
    %c0_i32_0 = arith.constant 0 : i32
    return %arg0, %arg1, %arg2, %c0_i32 : i32, i32, i32, i32
  }
  func.func @transform_1(%arg0: i32, %arg1: i32, %arg2: i32) -> (i32, i32, i32) {
    %c0_i32 = arith.constant 0 : i32
    %c0_i32_0 = arith.constant 0 : i32
    %c0_i32_1 = arith.constant 0 : i32
    %c0_i32_2 = arith.constant 0 : i32
    return %c0_i32, %c0_i32_0, %c0_i32_1 : i32, i32, i32
  }
  func.func @transform_2(%arg0: i32, %arg1: i32, %arg2: i32) -> (i32, i32) {
    %c0_i32 = arith.constant 0 : i32
    %c0_i32_0 = arith.constant 0 : i32
    %c0_i32_1 = arith.constant 0 : i32
    return %c0_i32, %c0_i32_0 : i32, i32
  }
  func.func @transform_3(%arg0: i32, %arg1: i32, %arg2: i32) -> (i32, i32) {
    %c0_i32 = arith.constant 0 : i32
    %c0_i32_0 = arith.constant 0 : i32
    %c0_i32_1 = arith.constant 0 : i32
    return %c0_i32, %c0_i32_0 : i32, i32
  }
  func.func @transform_4(%arg0: i32, %arg1: i32, %arg2: i32) -> (i32, i32) {
    %c0_i32 = arith.constant 0 : i32
    %c0_i32_0 = arith.constant 0 : i32
    %c0_i32_1 = arith.constant 0 : i32
    return %c0_i32, %c0_i32_0 : i32, i32
  }
  func.func @transform_5(%arg0: i32, %arg1: i32, %arg2: i32) -> (i32, i32, i32) {
    %c0_i32 = arith.constant 0 : i32
    %c0_i32_0 = arith.constant 0 : i32
    return %arg1, %arg2, %c0_i32 : i32, i32, i32
  }
  func.func @transform_6(%arg0: i32, %arg1: i32, %arg2: i32) -> (i32, i32, i32, i32) {
    %c0_i32 = arith.constant 0 : i32
    %c0_i32_0 = arith.constant 0 : i32
    return %arg0, %arg1, %arg2, %c0_i32 : i32, i32, i32, i32
  }
}

</mosaic_0001>

<llo_original>
// kernel: _lambda_.5
$region0: #{_lambda_.5}
  #allocation0 [shape = 'u32[]', space=smem, size = 0x4, offset = 0x4, fixed_abs, tag = 'smem constant byte address 0x4 - core index']
  #allocation1 [shape = 'u32[72,128]{1,0:T(1,128)}', space=vmem, size = 0x9000, scoped, tag = 'internal scratch']
  %s0 = inlined_call_operand.vmem [shape: bf16[2,12,16,64], index: 0, kind: input, shape index: {}]
  %s1 = inlined_call_operand.vmem [shape: bf16[4,64,128], index: 1, kind: input, shape index: {}]
  %s2 = inlined_call_operand.vmem [shape: f32[1,128], index: 2, kind: input, shape index: {}]
  %s3 = inlined_call_operand.vmem [shape: f32[1,128], index: 3, kind: input, shape index: {}]
  %s4 = inlined_call_operand.vmem [shape: f32[1,128], index: 4, kind: input, shape index: {}]
  %s5 = inlined_call_operand.vmem [shape: f32[9,16,128], index: 5, kind: input, shape index: {}]
  %s6 = inlined_call_operand.hbm [shape: bf16[2,3,16,128], index: 6, kind: output, shape index: {}]
  %s7 = sld [smem:[#allocation0]]
  $region57: #{_lambda_.5} parent=0
    _
  %s9 = ssub.s32 1, %s7
  %s10 = scalar_select 0, %s9, %s7
  $region1: #{_lambda_.5} parent=0
    #allocation2 [shape = 'u8[8192]{0}', space=vmem, size = 0x2000, scoped, tag = 'output window, operand 0']
    #allocation3 [shape = 's32[2]{0}', space=sflag, size = 0x8, scoped, tag = 'scoped memory for _lambda_.5']
    %11 = vsyncpa [#allocation3], 0
    %s12 = scalar_lea.sflag [#allocation3], 1
    %13 = vsyncpa %s12, 0
    loop: start=0, step=1, limit=8
    $region2: #{_lambda_.5} parent=1 // loop_pre_header
      _
    $region3: #{_lambda_.5} parent=1 // loop_header
      %s15 = sphi 0, %s19
      %p16 = scmp.ge.s32.totalorder %s15, 8
      %s22 = sphi 0, %s41
      %s23 = sphi 0, %s37
      %s24 = sphi 0, %s33
      %s25 = sphi 0, %s22
      %s26 = sphi 0, %s23
      %s27 = sphi 0, %s24
      %s28 = sphi 0, %s25
      %s29 = sphi 0, %s26
      %s30 = sphi 0, %s27
      %s48 = sphi 0, %s50
      %s51 = sphi 0, %s48
      %s52 = sphi 0, %s51
      %s68 = sphi 0, %s52
      %s72 = sphi 0, %s72
      %s74 = sphi 0, %s72
      %s75 = sphi 0, %s74
      %s89 = sphi 0, %s75
      %s93 = sphi 0, %s93
      %s95 = sphi 0, %s93
      %s96 = sphi 0, %s95
      %s110 = sphi 0, %s96
      %s114 = sphi 0, %s114
      %s116 = sphi 0, %s114
      %s117 = sphi 0, %s116
      %s131 = sphi 0, %s117
      %s135 = sphi 0, %s135
      %s137 = sphi 0, %s135
      %s138 = sphi 0, %s137
      %s152 = sphi 0, %s138
      %s160 = sphi 0, %s162
      %s163 = sphi 0, %s160
      %s164 = sphi 0, %s163
      %s180 = sphi 0, %s164
      %s190 = sphi 0, %s192
      %s193 = sphi 0, %s190
      %s194 = sphi 0, %s193
      %s210 = sphi 0, %s194
    $region4: #{_lambda_.5} parent=1 // loop_header_branch
      %18 = sbr.rel (%p16) target = $region8
    $region5: #{_lambda_.5} parent=1 // loop_body
      %s20 = ssub.s32 %s15, 1
      %s21 = ssub.s32 %s15, 2
      %s31 = sadd.s32 1, %s24
      %p32 = scmp.ge.s32.totalorder %s31, 1
      %s33 = scalar_select %p32, 0, %s31
      %s34 = sadd.s32 1, %s23
      %s35 = scalar_select %p32, %s34, %s23
      %p36 = scmp.ge.s32.totalorder %s35, 3
      %s37 = scalar_select %p36, 0, %s35
      %s38 = sadd.s32 1, %s22
      %s39 = scalar_select %p36, %s38, %s22
      %p40 = scmp.ge.s32.totalorder %s39, 2
      %s41 = scalar_select %p40, 0, %s39
      %s42 = ssub.s32 %s22, %s41
      %s43 = ssub.s32 %s23, %s37
      %s44 = sor.u32 %s42, %s43
      %s45 = ssub.s32 %s24, %s33
      %s46 = sor.u32 %s44, %s45
      %p47 = scmp.eq.s32.totalorder %s46, 0
      %s49 = sadd.s32 %s48, 1
      %s50 = scalar_select %p47, %s48, %s49
      %p53 = pneg %p47
      %p54 = scmp.eq.s32.totalorder %s15, 5
      %p55 = por %p53, %p54
      %p56 = scmp.ne.s32.totalorder %s48, %s51
      %p57 = scmp.eq.s32.totalorder %s15, 0
      %p58 = por %p56, %p57
      %p59 = scmp.ne.s32.totalorder %s48, %s51
      %p60 = scmp.eq.s32.totalorder %s20, 5
      %p61 = por %p59, %p60
      %p62 = scmp.ne.s32.totalorder %s51, %s52
      %p63 = scmp.eq.s32.totalorder %s20, 0
      %p64 = por %p62, %p63
      %p65 = scmp.ne.s32.totalorder %s51, %s52
      %p66 = scmp.eq.s32.totalorder %s21, 5
      %p67 = por %p65, %p66
      %p69 = scmp.ne.s32.totalorder %s52, %s68
      %p70 = scmp.eq.s32.totalorder %s21, 0
      %p71 = por %p69, %p70
      %s73 = sadd.s32 %s72, 1
      %p76 = scmp.eq.s32.totalorder %s15, 5
      %p77 = scmp.ne.s32.totalorder %s72, %s74
      %p78 = scmp.eq.s32.totalorder %s15, 0
      %p79 = por %p77, %p78
      %p80 = scmp.ne.s32.totalorder %s72, %s74
      %p81 = scmp.eq.s32.totalorder %s20, 5
      %p82 = por %p80, %p81
      %p83 = scmp.ne.s32.totalorder %s74, %s75
      %p84 = scmp.eq.s32.totalorder %s20, 0
      %p85 = por %p83, %p84
      %p86 = scmp.ne.s32.totalorder %s74, %s75
      %p87 = scmp.eq.s32.totalorder %s21, 5
      %p88 = por %p86, %p87
      %p90 = scmp.ne.s32.totalorder %s75, %s89
      %p91 = scmp.eq.s32.totalorder %s21, 0
      %p92 = por %p90, %p91
      %s94 = sadd.s32 %s93, 1
      %p97 = scmp.eq.s32.totalorder %s15, 5
      %p98 = scmp.ne.s32.totalorder %s93, %s95
      %p99 = scmp.eq.s32.totalorder %s15, 0
      %p100 = por %p98, %p99
      %p101 = scmp.ne.s32.totalorder %s93, %s95
      %p102 = scmp.eq.s32.totalorder %s20, 5
      %p103 = por %p101, %p102
      %p104 = scmp.ne.s32.totalorder %s95, %s96
      %p105 = scmp.eq.s32.totalorder %s20, 0
      %p106 = por %p104, %p105
      %p107 = scmp.ne.s32.totalorder %s95, %s96
      %p108 = scmp.eq.s32.totalorder %s21, 5
      %p109 = por %p107, %p108
      %p111 = scmp.ne.s32.totalorder %s96, %s110
      %p112 = scmp.eq.s32.totalorder %s21, 0
      %p113 = por %p111, %p112
      %s115 = sadd.s32 %s114, 1
      %p118 = scmp.eq.s32.totalorder %s15, 5
      %p119 = scmp.ne.s32.totalorder %s114, %s116
      %p120 = scmp.eq.s32.totalorder %s15, 0
      %p121 = por %p119, %p120
      %p122 = scmp.ne.s32.totalorder %s114, %s116
      %p123 = scmp.eq.s32.totalorder %s20, 5
      %p124 = por %p122, %p123
      %p125 = scmp.ne.s32.totalorder %s116, %s117
      %p126 = scmp.eq.s32.totalorder %s20, 0
      %p127 = por %p125, %p126
      %p128 = scmp.ne.s32.totalorder %s116, %s117
      %p129 = scmp.eq.s32.totalorder %s21, 5
      %p130 = por %p128, %p129
      %p132 = scmp.ne.s32.totalorder %s117, %s131
      %p133 = scmp.eq.s32.totalorder %s21, 0
      %p134 = por %p132, %p133
      %s136 = sadd.s32 %s135, 1
      %p139 = scmp.eq.s32.totalorder %s15, 5
      %p140 = scmp.ne.s32.totalorder %s135, %s137
      %p141 = scmp.eq.s32.totalorder %s15, 0
      %p142 = por %p140, %p141
      %p143 = scmp.ne.s32.totalorder %s135, %s137
      %p144 = scmp.eq.s32.totalorder %s20, 5
      %p145 = por %p143, %p144
      %p146 = scmp.ne.s32.totalorder %s137, %s138
      %p147 = scmp.eq.s32.totalorder %s20, 0
      %p148 = por %p146, %p147
      %p149 = scmp.ne.s32.totalorder %s137, %s138
      %p150 = scmp.eq.s32.totalorder %s21, 5
      %p151 = por %p149, %p150
      %p153 = scmp.ne.s32.totalorder %s138, %s152
      %p154 = scmp.eq.s32.totalorder %s21, 0
      %p155 = por %p153, %p154
      %s156 = ssub.s32 %s23, %s37
      %s157 = ssub.s32 %s24, %s33
      %s158 = sor.u32 %s156, %s157
      %p159 = scmp.eq.s32.totalorder %s158, 0
      %s161 = sadd.s32 %s160, 1
      %s162 = scalar_select %p159, %s160, %s161
      %p165 = pneg %p159
      %p166 = scmp.eq.s32.totalorder %s15, 5
      %p167 = por %p165, %p166
      %p168 = scmp.ne.s32.totalorder %s160, %s163
      %p169 = scmp.eq.s32.totalorder %s15, 0
      %p170 = por %p168, %p169
      %p171 = scmp.ne.s32.totalorder %s160, %s163
      %p172 = scmp.eq.s32.totalorder %s20, 5
      %p173 = por %p171, %p172
      %p174 = scmp.ne.s32.totalorder %s163, %s164
      %p175 = scmp.eq.s32.totalorder %s20, 0
      %p176 = por %p174, %p175
      %p177 = scmp.ne.s32.totalorder %s163, %s164
      %p178 = scmp.eq.s32.totalorder %s21, 5
      %p179 = por %p177, %p178
      %p181 = scmp.ne.s32.totalorder %s164, %s180
      %p182 = scmp.eq.s32.totalorder %s21, 0
      %p183 = por %p181, %p182
      %s184 = ssub.s32 %s22, %s41
      %s185 = ssub.s32 %s23, %s37
      %s186 = sor.u32 %s184, %s185
      %s187 = ssub.s32 %s24, %s33
      %s188 = sor.u32 %s186, %s187
      %p189 = scmp.eq.s32.totalorder %s188, 0
      %s191 = sadd.s32 %s190, 1
      %s192 = scalar_select %p189, %s190, %s191
      %p195 = pneg %p189
      %p196 = scmp.eq.s32.totalorder %s15, 5
      %p197 = por %p195, %p196
      %p198 = scmp.ne.s32.totalorder %s190, %s193
      %p199 = scmp.eq.s32.totalorder %s15, 0
      %p200 = por %p198, %p199
      %p201 = scmp.ne.s32.totalorder %s190, %s193
      %p202 = scmp.eq.s32.totalorder %s20, 5
      %p203 = por %p201, %p202
      %p204 = scmp.ne.s32.totalorder %s193, %s194
      %p205 = scmp.eq.s32.totalorder %s20, 0
      %p206 = por %p204, %p205
      %p207 = scmp.ne.s32.totalorder %s193, %s194
      %p208 = scmp.eq.s32.totalorder %s21, 5
      %p209 = por %p207, %p208
      %p211 = scmp.ne.s32.totalorder %s194, %s210
      %p212 = scmp.eq.s32.totalorder %s21, 0
      %p213 = por %p211, %p212
      %p214 = scmp.le.s32.totalorder 1, %s15
      %p215 = scmp.lt.s32.totalorder %s15, 7
      %p216 = pnand %p214, %p215
      %p217 = pneg %p216
      // Predicated region
      $region9: #{_lambda_.5} parent=5 // pred_check
        _
      $region10: #{_lambda_.5} parent=5 // pred_check_branch
        %219 = sbr.rel (%p216) target = $region12
      $region11: #{_lambda_.5} parent=5 // pred_region
        %s220 = ssub.s32 %s15, 1
        // Predicated region
        $region13: #{_lambda_.5} parent=11 // pred_check
          %p221 = pneg %p85
        $region14: #{_lambda_.5} parent=11 // pred_check_branch
          %223 = sbr.rel (%p221) target = $region16
        $region15: #{_lambda_.5} parent=11 // pred_region
          _
        $region16: #{_lambda_.5} parent=11 // pred_fallthru
          _
        // Predicated region
        $region17: #{_lambda_.5} parent=11 // pred_check
          %p224 = pneg %p106
        $region18: #{_lambda_.5} parent=11 // pred_check_branch
          %226 = sbr.rel (%p224) target = $region20
        $region19: #{_lambda_.5} parent=11 // pred_region
          _
        $region20: #{_lambda_.5} parent=11 // pred_fallthru
          _
        // Predicated region
        $region21: #{_lambda_.5} parent=11 // pred_check
          %p227 = pneg %p127
        $region22: #{_lambda_.5} parent=11 // pred_check_branch
          %229 = sbr.rel (%p227) target = $region24
        $region23: #{_lambda_.5} parent=11 // pred_region
          _
        $region24: #{_lambda_.5} parent=11 // pred_fallthru
          _
        // Predicated region
        $region25: #{_lambda_.5} parent=11 // pred_check
          %p230 = pneg %p148
        $region26: #{_lambda_.5} parent=11 // pred_check_branch
          %232 = sbr.rel (%p230) target = $region28
        $region27: #{_lambda_.5} parent=11 // pred_region
          _
        $region28: #{_lambda_.5} parent=11 // pred_fallthru
          _
      $region12: #{_lambda_.5} parent=5 // pred_fallthru
        _
      %p233 = scmp.lt.s32.totalorder %s15, 6
      // Predicated region
      $region29: #{_lambda_.5} parent=5 // pred_check
        %p234 = pneg %p233
      $region30: #{_lambda_.5} parent=5 // pred_check_branch
        %236 = sbr.rel (%p234) target = $region32
      $region31: #{_lambda_.5} parent=5 // pred_region
        // Predicated region
        $region33: #{_lambda_.5} parent=31 // pred_check
          %p237 = pneg %p58
        $region34: #{_lambda_.5} parent=31 // pred_check_branch
          %239 = sbr.rel (%p237) target = $region36
        $region35: #{_lambda_.5} parent=31 // pred_region
          %s240 = smul.u32 4, %s23
          %s241 = smul.u32 2, %s24
          %p242 = scmp.lt.s32.totalorder %s22, 1
          %s243 = scalar_select %p242, %s22, 1
          %p244 = scmp.lt.s32.totalorder %s240, 11
          %s245 = scalar_select %p244, %s240, 11
          %p246 = scmp.lt.s32.totalorder %s241, 1
          %s247 = scalar_select %p246, %s241, 1
          %s248 = smul.addr %s245, 2
          %s249 = sadd.s32 %s247, %s248
          %s250 = smul.addr %s243, 24
          %s251 = sadd.s32 %s249, %s250
          %s252 = smul.addr %s251, 4
          %s253 = scalar_lea.vmem %s0, %s252
          %s254 = smul.u32 4, %s23
          %s255 = smul.u32 2, %s24
        $region36: #{_lambda_.5} parent=31 // pred_fallthru
          _
        // Predicated region
        $region37: #{_lambda_.5} parent=31 // pred_check
          %p256 = pneg %p170
        $region38: #{_lambda_.5} parent=31 // pred_check_branch
          %258 = sbr.rel (%p256) target = $region40
        $region39: #{_lambda_.5} parent=31 // pred_region
          %s259 = smul.u32 2, %s24
          %p260 = scmp.lt.s32.totalorder %s23, 8
          %s261 = scalar_select %p260, %s23, 8
          %p262 = scmp.lt.s32.totalorder %s259, 1
          %s263 = scalar_select %p262, %s259, 1
          %s264 = smul.addr %s261, 2
          %s265 = sadd.s32 %s263, %s264
          %s266 = smul.addr %s265, 8
          %s267 = scalar_lea.vmem %s5, %s266
          %s268 = smul.u32 2, %s24
        $region40: #{_lambda_.5} parent=31 // pred_fallthru
          _
      $region32: #{_lambda_.5} parent=5 // pred_fallthru
        _
      %p269 = scmp.le.s32.totalorder 1, %s15
      %p270 = scmp.lt.s32.totalorder %s15, 7
      %p271 = pnand %p269, %p270
      %p272 = pneg %p271
      // Predicated region
      $region41: #{_lambda_.5} parent=5 // pred_check
        _
      $region42: #{_lambda_.5} parent=5 // pred_check_branch
        %274 = sbr.rel (%p271) target = $region44
      $region43: #{_lambda_.5} parent=5 // pred_region
        %s275 = ssub.s32 %s15, 1
        %s276 = smul.u32 4, %s26
        %s277 = smul.u32 2, %s27
        %p278 = scmp.lt.s32.totalorder %s25, 1
        %s279 = scalar_select %p278, %s25, 1
        %p280 = scmp.lt.s32.totalorder %s276, 11
        %s281 = scalar_select %p280, %s276, 11
        %p282 = scmp.lt.s32.totalorder %s277, 1
        %s283 = scalar_select %p282, %s277, 1
        %s284 = smul.addr %s281, 2
        %s285 = sadd.s32 %s283, %s284
        %s286 = smul.addr %s279, 24
        %s287 = sadd.s32 %s285, %s286
        %s288 = smul.addr %s287, 4
        %s289 = scalar_lea.vmem %s0, %s288
        %p290 = pneg %p64
        %p291 = pneg %p61
        %p292 = pneg %p85
        %p293 = pneg %p82
        %p294 = pneg %p106
        %p295 = pneg %p103
        %p296 = pneg %p127
        %p297 = pneg %p124
        %p298 = pneg %p148
        %p299 = pneg %p145
        %s300 = smul.u32 2, %s27
        %p301 = scmp.lt.s32.totalorder %s26, 8
        %s302 = scalar_select %p301, %s26, 8
        %p303 = scmp.lt.s32.totalorder %s300, 1
        %s304 = scalar_select %p303, %s300, 1
        %s305 = smul.addr %s302, 2
        %s306 = sadd.s32 %s304, %s305
        %s307 = smul.addr %s306, 8
        %s308 = scalar_lea.vmem %s5, %s307
        %p309 = pneg %p176
        %p310 = pneg %p173
        %p311 = pneg %p206
        %p312 = pneg %p203
        %s313 = sand.u32 %s193, 1
        %s314 = scalar_lea.sflag [#allocation3], %s313
        %s315 = sand.u32 %s193, 1
        %s316 = smul.addr %s315, 8
        %s317 = scalar_lea.vmem [#allocation2], %s316
        %s318 = smul.u32 4, %s26
        %s319 = smul.u32 2, %s27
        %p320 = scmp.lt.s32.totalorder %s25, 1
        %s321 = scalar_select %p320, %s25, 1
        %p322 = scmp.lt.s32.totalorder %s318, 11
        %s323 = scalar_select %p322, %s318, 11
        %p324 = scmp.lt.s32.totalorder %s319, 1
        %s325 = scalar_select %p324, %s319, 1
        %s326 = smul.addr %s323, 2
        %s327 = sadd.s32 %s325, %s326
        %s328 = smul.addr %s321, 24
        %s329 = sadd.s32 %s327, %s328
        %s330 = smul.addr %s329, 4
        %s331 = scalar_lea.vmem %s0, %s330
        %s332 = smul.u32 4, %s26
        %s333 = smul.u32 2, %s27
        %s334 = smul.u32 2, %s27
        %p335 = scmp.lt.s32.totalorder %s26, 8
        %s336 = scalar_select %p335, %s26, 8
        %p337 = scmp.lt.s32.totalorder %s334, 1
        %s338 = scalar_select %p337, %s334, 1
        %s339 = smul.addr %s336, 2
        %s340 = sadd.s32 %s338, %s339
        %s341 = smul.addr %s340, 8
        %s342 = scalar_lea.vmem %s5, %s341
        %s343 = smul.u32 2, %s27
        %s344 = smul.u32 2, %s27
        %v346 = vld [vmem:[%s331] sm:$0xf]
        %v347 = vld [vmem:[%s331 + $0x4] sm:$0xf]
        %v348 = vld [vmem:[%s1] sm:$0xf]
        %v349 = vld [vmem:[%s1 + $0x4] sm:$0xf]
        %v350 = vld [vmem:[%s1 + $0x8] sm:$0xf]
        %v351 = vld [vmem:[%s1 + $0xc] sm:$0xf]
        %v352 = vld [vmem:[%s1 + $0x10] sm:$0xf]
        %v353 = vld [vmem:[%s1 + $0x14] sm:$0xf]
        %v354 = vld [vmem:[%s1 + $0x18] sm:$0xf]
        %v355 = vld [vmem:[%s1 + $0x1c] sm:$0xf]
        %s356 = scalar_lea.vmem %s331, 8
        %v357 = vld [vmem:[%s356] sm:$0xf]
        %v358 = vld [vmem:[%s356 + $0x4] sm:$0xf]
        %s359 = scalar_lea.vmem %s1, 32
        %v360 = vld [vmem:[%s359] sm:$0xf]
        %v361 = vld [vmem:[%s359 + $0x4] sm:$0xf]
        %v362 = vld [vmem:[%s359 + $0x8] sm:$0xf]
        %v363 = vld [vmem:[%s359 + $0xc] sm:$0xf]
        %v364 = vld [vmem:[%s359 + $0x10] sm:$0xf]
        %v365 = vld [vmem:[%s359 + $0x14] sm:$0xf]
        %v366 = vld [vmem:[%s359 + $0x18] sm:$0xf]
        %v367 = vld [vmem:[%s359 + $0x1c] sm:$0xf]
        %v370 = vunpack.c.l.b16 %v357
        %v371 = vunpack.c.l.b16 %v358
        %v372 = vpack.c.b16 %v371, %v370
        %v381 = vunpack.c.l.b16 %v360
        %v382 = vunpack.c.l.b16 %v361
        %v383 = vunpack.c.l.b16 %v362
        %v384 = vunpack.c.l.b16 %v363
        %v385 = vunpack.c.l.b16 %v364
        %v386 = vunpack.c.l.b16 %v365
        %v387 = vunpack.c.l.b16 %v366
        %v388 = vunpack.c.l.b16 %v367
        %v389 = vpack.c.b16 %v382, %v381
        %v390 = vpack.c.b16 %v384, %v383
        %v391 = vpack.c.b16 %v386, %v385
        %v392 = vpack.c.b16 %v388, %v387
        %vm397 = vcmask 523264
        %v399 = vsel %vm397, %v372, 0
        %401 = vmatpush.bf16.msra.mxu0 0
        %402 = vmatpush.bf16.msra.mxu0 0
        %403 = vmatpush.bf16.msra.mxu0 0
        %404 = vmatpush.bf16.msra.mxu0 0
        %405 = vmatpush.bf16.msra.mxu0 %v392
        %406 = vmatpush.bf16.msra.mxu0 %v391
        %407 = vmatpush.bf16.msra.mxu0 %v390
        %408 = vmatpush.bf16.msra.mxu0 %v389
        %409 = vmatmul.bf16.gmra.mxu0 %v399
        %v410 = vpop.f32.mrf.mxu0
        %v411 = vadd.f32 0.0, %v410
        %v412 = vpop.f32.mrf.mxu0
        %v413 = vadd.f32 0.0, %v412
        %414 = vdwg.mxu0
        %v417 = vunpack.c.l.b16 %v346
        %v418 = vunpack.c.l.b16 %v347
        %v419 = vpack.c.b16 %v418, %v417
        %v428 = vunpack.c.l.b16 %v348
        %v429 = vunpack.c.l.b16 %v349
        %v430 = vunpack.c.l.b16 %v350
        %v431 = vunpack.c.l.b16 %v351
        %v432 = vunpack.c.l.b16 %v352
        %v433 = vunpack.c.l.b16 %v353
        %v434 = vunpack.c.l.b16 %v354
        %v435 = vunpack.c.l.b16 %v355
        %v436 = vpack.c.b16 %v429, %v428
        %v437 = vpack.c.b16 %v431, %v430
        %v438 = vpack.c.b16 %v433, %v432
        %v439 = vpack.c.b16 %v435, %v434
        %v445 = vsel %vm397, %v419, 0
        %447 = vmatpush.bf16.msra.mxu0 0
        %448 = vmatpush.bf16.msra.mxu0 0
        %449 = vmatpush.bf16.msra.mxu0 0
        %450 = vmatpush.bf16.msra.mxu0 0
        %451 = vmatpush.bf16.msra.mxu0 %v439
        %452 = vmatpush.bf16.msra.mxu0 %v438
        %453 = vmatpush.bf16.msra.mxu0 %v437
        %454 = vmatpush.bf16.msra.mxu0 %v436
        %455 = vmatmul.bf16.gmra.mxu0 %v445
        %v456 = vpop.f32.mrf.mxu0
        %v457 = vadd.f32 %v411, %v456
        %v458 = vpop.f32.mrf.mxu0
        %v459 = vadd.f32 %v413, %v458
        %460 = vdwg.mxu0
        %s461 = scalar_lea.vmem %s331, 16
        %v462 = vld [vmem:[%s461] sm:$0xf]
        %v463 = vld [vmem:[%s461 + $0x4] sm:$0xf]
        %s464 = scalar_lea.vmem %s1, 64
        %v465 = vld [vmem:[%s464] sm:$0xf]
        %v466 = vld [vmem:[%s464 + $0x4] sm:$0xf]
        %v467 = vld [vmem:[%s464 + $0x8] sm:$0xf]
        %v468 = vld [vmem:[%s464 + $0xc] sm:$0xf]
        %v469 = vld [vmem:[%s464 + $0x10] sm:$0xf]
        %v470 = vld [vmem:[%s464 + $0x14] sm:$0xf]
        %v471 = vld [vmem:[%s464 + $0x18] sm:$0xf]
        %v472 = vld [vmem:[%s464 + $0x1c] sm:$0xf]
        %v475 = vunpack.c.l.b16 %v462
        %v476 = vunpack.c.l.b16 %v463
        %v477 = vpack.c.b16 %v476, %v475
        %v486 = vunpack.c.l.b16 %v465
        %v487 = vunpack.c.l.b16 %v466
        %v488 = vunpack.c.l.b16 %v467
        %v489 = vunpack.c.l.b16 %v468
        %v490 = vunpack.c.l.b16 %v469
        %v491 = vunpack.c.l.b16 %v470
        %v492 = vunpack.c.l.b16 %v471
        %v493 = vunpack.c.l.b16 %v472
        %v494 = vpack.c.b16 %v487, %v486
        %v495 = vpack.c.b16 %v489, %v488
        %v496 = vpack.c.b16 %v491, %v490
        %v497 = vpack.c.b16 %v493, %v492
        %v503 = vsel %vm397, %v477, 0
        %505 = vmatpush.bf16.msra.mxu0 0
        %506 = vmatpush.bf16.msra.mxu0 0
        %507 = vmatpush.bf16.msra.mxu0 0
        %508 = vmatpush.bf16.msra.mxu0 0
        %509 = vmatpush.bf16.msra.mxu0 %v497
        %510 = vmatpush.bf16.msra.mxu0 %v496
        %511 = vmatpush.bf16.msra.mxu0 %v495
        %512 = vmatpush.bf16.msra.mxu0 %v494
        %513 = vmatmul.bf16.gmra.mxu0 %v503
        %v514 = vpop.f32.mrf.mxu0
        %v515 = vadd.f32 0.0, %v514
        %v516 = vpop.f32.mrf.mxu0
        %v517 = vadd.f32 0.0, %v516
        %518 = vdwg.mxu0
        %v519 = vadd.f32 %v457, %v515
        %v520 = vadd.f32 %v459, %v517
        %s521 = scalar_lea.vmem %s331, 24
        %v522 = vld [vmem:[%s521] sm:$0xf]
        %v523 = vld [vmem:[%s521 + $0x4] sm:$0xf]
        %s524 = scalar_lea.vmem %s1, 96
        %v525 = vld [vmem:[%s524] sm:$0xf]
        %v526 = vld [vmem:[%s524 + $0x4] sm:$0xf]
        %v527 = vld [vmem:[%s524 + $0x8] sm:$0xf]
        %v528 = vld [vmem:[%s524 + $0xc] sm:$0xf]
        %v529 = vld [vmem:[%s524 + $0x10] sm:$0xf]
        %v530 = vld [vmem:[%s524 + $0x14] sm:$0xf]
        %v531 = vld [vmem:[%s524 + $0x18] sm:$0xf]
        %v532 = vld [vmem:[%s524 + $0x1c] sm:$0xf]
        %v535 = vunpack.c.l.b16 %v522
        %v536 = vunpack.c.l.b16 %v523
        %v537 = vpack.c.b16 %v536, %v535
        %v546 = vunpack.c.l.b16 %v525
        %v547 = vunpack.c.l.b16 %v526
        %v548 = vunpack.c.l.b16 %v527
        %v549 = vunpack.c.l.b16 %v528
        %v550 = vunpack.c.l.b16 %v529
        %v551 = vunpack.c.l.b16 %v530
        %v552 = vunpack.c.l.b16 %v531
        %v553 = vunpack.c.l.b16 %v532
        %v554 = vpack.c.b16 %v547, %v546
        %v555 = vpack.c.b16 %v549, %v548
        %v556 = vpack.c.b16 %v551, %v550
        %v557 = vpack.c.b16 %v553, %v552
        %v563 = vsel %vm397, %v537, 0
        %565 = vmatpush.bf16.msra.mxu0 0
        %566 = vmatpush.bf16.msra.mxu0 0
        %567 = vmatpush.bf16.msra.mxu0 0
        %568 = vmatpush.bf16.msra.mxu0 0
        %569 = vmatpush.bf16.msra.mxu0 %v557
        %570 = vmatpush.bf16.msra.mxu0 %v556
        %571 = vmatpush.bf16.msra.mxu0 %v555
        %572 = vmatpush.bf16.msra.mxu0 %v554
        %573 = vmatmul.bf16.gmra.mxu0 %v563
        %v574 = vpop.f32.mrf.mxu0
        %v575 = vadd.f32 0.0, %v574
        %v576 = vpop.f32.mrf.mxu0
        %v577 = vadd.f32 0.0, %v576
        %578 = vdwg.mxu0
        %v579 = vadd.f32 %v519, %v575
        %v580 = vadd.f32 %v520, %v577
        %v581 = vld [vmem:[%s2] sm:$0x1]
        %v583 = vperm.slane %v581, 0
        %v585 = vadd.f32 %v579, %v583
        %v586 = vadd.f32 %v580, %v583
        %587 = vadd.xlane.f32.xlu0 %v585
        %v588 = vpop.xlane.xlu0 %587
        %589 = vadd.xlane.f32.xlu0 %v586
        %v590 = vpop.xlane.xlu0 %589
        %v591 = vrcp.pop 128.0
        %v592 = vmul.f32 128.0, %v591
        %v593 = vsub.f32 1.0, %v592
        %v594 = vmul.f32 %v591, %v593
        %v595 = vadd.f32 %v591, %v594
        %vm596 = vweird.f32 %v591
        %v597 = vsel %vm596, %v591, %v595
        %v598 = vmul.f32 %v588, %v597
        %v599 = vmul.f32 %v590, %v597
        %v600 = vsub.f32 %v585, %v598
        %v601 = vsub.f32 %v586, %v599
        %v602 = vmul.f32 %v600, %v600
        %v603 = vmul.f32 %v601, %v601
        %604 = vadd.xlane.f32.xlu0 %v602
        %v605 = vpop.xlane.xlu0 %604
        %606 = vadd.xlane.f32.xlu0 %v603
        %v607 = vpop.xlane.xlu0 %606
        %v608 = vmul.f32 %v605, %v597
        %v609 = vmul.f32 %v607, %v597
        %v610 = vld [vmem:[%s3] sm:$0x1]
        %v611 = vadd.f32 %v608, 1e-05
        %v612 = vadd.f32 %v609, 1e-05
        %v613 = vrsqrt.pop %v611
        %v614 = vmul.f32 %v613, %v611
        %v615 = vmul.f32 %v614, %v613
        %v616 = vmul.f32 0.5, %v615
        %v617 = vsub.f32 1.5, %v616
        %v618 = vmul.f32 %v613, %v617
        %vm619 = vweird.f32 %v611
        %vm620 = vweird.f32 %v613
        %vm621 = vmor %vm619, %vm620
        %v622 = vsel %vm621, %v613, %v618
        %v623 = vrsqrt.pop %v612
        %v624 = vmul.f32 %v623, %v612
        %v625 = vmul.f32 %v624, %v623
        %v626 = vmul.f32 0.5, %v625
        %v627 = vsub.f32 1.5, %v626
        %v628 = vmul.f32 %v623, %v627
        %vm629 = vweird.f32 %v612
        %vm630 = vweird.f32 %v623
        %vm631 = vmor %vm629, %vm630
        %v632 = vsel %vm631, %v623, %v628
        %v634 = vperm.slane %v610, 0
        %v636 = vmul.f32 %v634, %v622
        %v637 = vmul.f32 %v634, %v632
        %v638 = vmul.f32 %v600, %v636
        %v639 = vmul.f32 %v601, %v637
        %v640 = vld [vmem:[%s4] sm:$0x1]
        %v641 = vld [vmem:[%s342] sm:$0xff]
        %v642 = vld [vmem:[%s342 + $0x8] sm:$0xff]
        %v644 = vperm.slane %v640, 0
        %v646 = vadd.f32 %v644, %v641
        %v647 = vadd.f32 %v644, %v642
        %v648 = vadd.f32 %v638, %v646
        %v649 = vadd.f32 %v639, %v647
        %v650 = vpack.c.bf16 %v648, %v648
        %v651 = vpack.c.bf16 %v649, %v649
        %652 = vst [vmem:[%s317] sm:$0xf] %v650
        %653 = vst [vmem:[%s317 + $0x4] sm:$0xf] %v651
        %s654 = sand.u32 %s193, 1
        %s655 = scalar_lea.sflag [#allocation3], %s654
        %s656 = sand.u32 %s193, 1
        %s657 = smul.addr %s656, 8
        %s658 = scalar_lea.vmem [#allocation2], %s657
        // Predicated region
        $region45: #{_lambda_.5} parent=43 // pred_check
          %p659 = pneg %p203
        $region46: #{_lambda_.5} parent=43 // pred_check_branch
          %661 = sbr.rel (%p659) target = $region48
        $region47: #{_lambda_.5} parent=43 // pred_region
          %s662 = smul.u32 2, %s27
          %664 = vsyncadd %s655, 0
          %s665 = smul.addr %s26, 2
          %s666 = sadd.s32 %s662, %s665
          %s667 = smul.addr %s25, 6
          %s668 = sadd.s32 %s666, %s667
          %s669 = smul.addr %s668, 4
          %s670 = scalar_lea.hbm %s6, %s669
          %s671 = sshll.u32 %s658, 4
          %s672 = int_to_ptr.vmem [resolvable:$true] %s671
          %s673 = sshll.u32 %s670, 4
          %s674 = int_to_ptr.hbm [resolvable:$true] %s673
          %679 = dma.vmem_to_hbm [thread:$0]  %s672, 128, %s674, %s655, 64, 64, 4
        $region48: #{_lambda_.5} parent=43 // pred_fallthru
          _
      $region44: #{_lambda_.5} parent=5 // pred_fallthru
        _
      %p680 = scmp.le.s32.totalorder 2, %s15
      // Predicated region
      $region49: #{_lambda_.5} parent=5 // pred_check
        %p681 = pneg %p680
      $region50: #{_lambda_.5} parent=5 // pred_check_branch
        %683 = sbr.rel (%p681) target = $region52
      $region51: #{_lambda_.5} parent=5 // pred_region
        %s684 = ssub.s32 %s15, 2
        // Predicated region
        $region53: #{_lambda_.5} parent=51 // pred_check
          %p685 = pneg %p209
        $region54: #{_lambda_.5} parent=51 // pred_check_branch
          %687 = sbr.rel (%p685) target = $region56
        $region55: #{_lambda_.5} parent=51 // pred_region
          %s688 = sand.u32 %s194, 1
          %s689 = scalar_lea.sflag [#allocation3], %s688
          %s690 = sand.u32 %s194, 1
          %s691 = smul.addr %s690, 8
          %s692 = scalar_lea.vmem [#allocation2], %s691
          %694 = dma.done %s689, 128
        $region56: #{_lambda_.5} parent=51 // pred_fallthru
          _
      $region52: #{_lambda_.5} parent=5 // pred_fallthru
        _
    $region6: #{_lambda_.5} parent=1 // loop_footer
      %s19 = sadd.s32 1, %s15
    $region7: #{_lambda_.5} parent=1 // loop_footer_branch
      %14 = sbr.rel target = $region3
    $region8: #{_lambda_.5} parent=1 // loop_exit
      _
    %695 = vsyncpa [#allocation3], 1
    %s696 = scalar_lea.sflag [#allocation3], 1
    %697 = vsyncpa %s696, 1

// kernel: _lambda_.3
$region0: #{_lambda_.3}
  #allocation0 [shape = 'u32[]', space=smem, size = 0x4, offset = 0x4, fixed_abs, tag = 'smem constant byte address 0x4 - core index']
  #allocation1 [shape = 'u32[72,128]{1,0:T(1,128)}', space=vmem, size = 0x9000, scoped, tag = 'internal scratch']
  %s0 = inlined_call_operand.vmem [shape: bf16[2,12,16,64], index: 0, kind: input, shape index: {}]
  %s1 = inlined_call_operand.vmem [shape: bf16[1,64,128], index: 1, kind: input, shape index: {}]
  %s2 = inlined_call_operand.vmem [shape: f32[1,128], index: 2, kind: input, shape index: {}]
  %s3 = inlined_call_operand.vmem [shape: f32[1,128], index: 3, kind: input, shape index: {}]
  %s4 = inlined_call_operand.vmem [shape: f32[1,128], index: 4, kind: input, shape index: {}]
  %s5 = inlined_call_operand.vmem [shape: f32[9,16,128], index: 5, kind: input, shape index: {}]
  %s6 = inlined_call_operand.hbm [shape: bf16[2,9,16,128], index: 6, kind: output, shape index: {}]
  %s7 = sld [smem:[#allocation0]]
  $region57: #{_lambda_.3} parent=0
    _
  %s9 = ssub.s32 1, %s7
  %s10 = scalar_select 0, %s9, %s7
  $region1: #{_lambda_.3} parent=0
    #allocation2 [shape = 'u8[8192]{0}', space=vmem, size = 0x2000, scoped, tag = 'output window, operand 0']
    #allocation3 [shape = 's32[2]{0}', space=sflag, size = 0x8, scoped, tag = 'scoped memory for _lambda_.3']
    %11 = vsyncpa [#allocation3], 0
    %s12 = scalar_lea.sflag [#allocation3], 1
    %13 = vsyncpa %s12, 0
    loop: start=0, step=1, limit=20
    $region2: #{_lambda_.3} parent=1 // loop_pre_header
      _
    $region3: #{_lambda_.3} parent=1 // loop_header
      %s15 = sphi 0, %s19
      %p16 = scmp.ge.s32.totalorder %s15, 20
      %s22 = sphi 0, %s41
      %s23 = sphi 0, %s37
      %s24 = sphi 0, %s33
      %s25 = sphi 0, %s22
      %s26 = sphi 0, %s23
      %s27 = sphi 0, %s24
      %s28 = sphi 0, %s25
      %s29 = sphi 0, %s26
      %s30 = sphi 0, %s27
      %s48 = sphi 0, %s50
      %s51 = sphi 0, %s48
      %s52 = sphi 0, %s51
      %s68 = sphi 0, %s52
      %s72 = sphi 0, %s72
      %s74 = sphi 0, %s72
      %s75 = sphi 0, %s74
      %s89 = sphi 0, %s75
      %s93 = sphi 0, %s93
      %s95 = sphi 0, %s93
      %s96 = sphi 0, %s95
      %s110 = sphi 0, %s96
      %s114 = sphi 0, %s114
      %s116 = sphi 0, %s114
      %s117 = sphi 0, %s116
      %s131 = sphi 0, %s117
      %s135 = sphi 0, %s135
      %s137 = sphi 0, %s135
      %s138 = sphi 0, %s137
      %s152 = sphi 0, %s138
      %s160 = sphi 0, %s162
      %s163 = sphi 0, %s160
      %s164 = sphi 0, %s163
      %s180 = sphi 0, %s164
      %s190 = sphi 0, %s192
      %s193 = sphi 0, %s190
      %s194 = sphi 0, %s193
      %s210 = sphi 0, %s194
    $region4: #{_lambda_.3} parent=1 // loop_header_branch
      %18 = sbr.rel (%p16) target = $region8
    $region5: #{_lambda_.3} parent=1 // loop_body
      %s20 = ssub.s32 %s15, 1
      %s21 = ssub.s32 %s15, 2
      %s31 = sadd.s32 1, %s24
      %p32 = scmp.ge.s32.totalorder %s31, 1
      %s33 = scalar_select %p32, 0, %s31
      %s34 = sadd.s32 1, %s23
      %s35 = scalar_select %p32, %s34, %s23
      %p36 = scmp.ge.s32.totalorder %s35, 9
      %s37 = scalar_select %p36, 0, %s35
      %s38 = sadd.s32 1, %s22
      %s39 = scalar_select %p36, %s38, %s22
      %p40 = scmp.ge.s32.totalorder %s39, 2
      %s41 = scalar_select %p40, 0, %s39
      %s42 = ssub.s32 %s22, %s41
      %s43 = ssub.s32 %s23, %s37
      %s44 = sor.u32 %s42, %s43
      %s45 = ssub.s32 %s24, %s33
      %s46 = sor.u32 %s44, %s45
      %p47 = scmp.eq.s32.totalorder %s46, 0
      %s49 = sadd.s32 %s48, 1
      %s50 = scalar_select %p47, %s48, %s49
      %p53 = pneg %p47
      %p54 = scmp.eq.s32.totalorder %s15, 17
      %p55 = por %p53, %p54
      %p56 = scmp.ne.s32.totalorder %s48, %s51
      %p57 = scmp.eq.s32.totalorder %s15, 0
      %p58 = por %p56, %p57
      %p59 = scmp.ne.s32.totalorder %s48, %s51
      %p60 = scmp.eq.s32.totalorder %s20, 17
      %p61 = por %p59, %p60
      %p62 = scmp.ne.s32.totalorder %s51, %s52
      %p63 = scmp.eq.s32.totalorder %s20, 0
      %p64 = por %p62, %p63
      %p65 = scmp.ne.s32.totalorder %s51, %s52
      %p66 = scmp.eq.s32.totalorder %s21, 17
      %p67 = por %p65, %p66
      %p69 = scmp.ne.s32.totalorder %s52, %s68
      %p70 = scmp.eq.s32.totalorder %s21, 0
      %p71 = por %p69, %p70
      %s73 = sadd.s32 %s72, 1
      %p76 = scmp.eq.s32.totalorder %s15, 17
      %p77 = scmp.ne.s32.totalorder %s72, %s74
      %p78 = scmp.eq.s32.totalorder %s15, 0
      %p79 = por %p77, %p78
      %p80 = scmp.ne.s32.totalorder %s72, %s74
      %p81 = scmp.eq.s32.totalorder %s20, 17
      %p82 = por %p80, %p81
      %p83 = scmp.ne.s32.totalorder %s74, %s75
      %p84 = scmp.eq.s32.totalorder %s20, 0
      %p85 = por %p83, %p84
      %p86 = scmp.ne.s32.totalorder %s74, %s75
      %p87 = scmp.eq.s32.totalorder %s21, 17
      %p88 = por %p86, %p87
      %p90 = scmp.ne.s32.totalorder %s75, %s89
      %p91 = scmp.eq.s32.totalorder %s21, 0
      %p92 = por %p90, %p91
      %s94 = sadd.s32 %s93, 1
      %p97 = scmp.eq.s32.totalorder %s15, 17
      %p98 = scmp.ne.s32.totalorder %s93, %s95
      %p99 = scmp.eq.s32.totalorder %s15, 0
      %p100 = por %p98, %p99
      %p101 = scmp.ne.s32.totalorder %s93, %s95
      %p102 = scmp.eq.s32.totalorder %s20, 17
      %p103 = por %p101, %p102
      %p104 = scmp.ne.s32.totalorder %s95, %s96
      %p105 = scmp.eq.s32.totalorder %s20, 0
      %p106 = por %p104, %p105
      %p107 = scmp.ne.s32.totalorder %s95, %s96
      %p108 = scmp.eq.s32.totalorder %s21, 17
      %p109 = por %p107, %p108
      %p111 = scmp.ne.s32.totalorder %s96, %s110
      %p112 = scmp.eq.s32.totalorder %s21, 0
      %p113 = por %p111, %p112
      %s115 = sadd.s32 %s114, 1
      %p118 = scmp.eq.s32.totalorder %s15, 17
      %p119 = scmp.ne.s32.totalorder %s114, %s116
      %p120 = scmp.eq.s32.totalorder %s15, 0
      %p121 = por %p119, %p120
      %p122 = scmp.ne.s32.totalorder %s114, %s116
      %p123 = scmp.eq.s32.totalorder %s20, 17
      %p124 = por %p122, %p123
      %p125 = scmp.ne.s32.totalorder %s116, %s117
      %p126 = scmp.eq.s32.totalorder %s20, 0
      %p127 = por %p125, %p126
      %p128 = scmp.ne.s32.totalorder %s116, %s117
      %p129 = scmp.eq.s32.totalorder %s21, 17
      %p130 = por %p128, %p129
      %p132 = scmp.ne.s32.totalorder %s117, %s131
      %p133 = scmp.eq.s32.totalorder %s21, 0
      %p134 = por %p132, %p133
      %s136 = sadd.s32 %s135, 1
      %p139 = scmp.eq.s32.totalorder %s15, 17
      %p140 = scmp.ne.s32.totalorder %s135, %s137
      %p141 = scmp.eq.s32.totalorder %s15, 0
      %p142 = por %p140, %p141
      %p143 = scmp.ne.s32.totalorder %s135, %s137
      %p144 = scmp.eq.s32.totalorder %s20, 17
      %p145 = por %p143, %p144
      %p146 = scmp.ne.s32.totalorder %s137, %s138
      %p147 = scmp.eq.s32.totalorder %s20, 0
      %p148 = por %p146, %p147
      %p149 = scmp.ne.s32.totalorder %s137, %s138
      %p150 = scmp.eq.s32.totalorder %s21, 17
      %p151 = por %p149, %p150
      %p153 = scmp.ne.s32.totalorder %s138, %s152
      %p154 = scmp.eq.s32.totalorder %s21, 0
      %p155 = por %p153, %p154
      %s156 = ssub.s32 %s23, %s37
      %s157 = ssub.s32 %s24, %s33
      %s158 = sor.u32 %s156, %s157
      %p159 = scmp.eq.s32.totalorder %s158, 0
      %s161 = sadd.s32 %s160, 1
      %s162 = scalar_select %p159, %s160, %s161
      %p165 = pneg %p159
      %p166 = scmp.eq.s32.totalorder %s15, 17
      %p167 = por %p165, %p166
      %p168 = scmp.ne.s32.totalorder %s160, %s163
      %p169 = scmp.eq.s32.totalorder %s15, 0
      %p170 = por %p168, %p169
      %p171 = scmp.ne.s32.totalorder %s160, %s163
      %p172 = scmp.eq.s32.totalorder %s20, 17
      %p173 = por %p171, %p172
      %p174 = scmp.ne.s32.totalorder %s163, %s164
      %p175 = scmp.eq.s32.totalorder %s20, 0
      %p176 = por %p174, %p175
      %p177 = scmp.ne.s32.totalorder %s163, %s164
      %p178 = scmp.eq.s32.totalorder %s21, 17
      %p179 = por %p177, %p178
      %p181 = scmp.ne.s32.totalorder %s164, %s180
      %p182 = scmp.eq.s32.totalorder %s21, 0
      %p183 = por %p181, %p182
      %s184 = ssub.s32 %s22, %s41
      %s185 = ssub.s32 %s23, %s37
      %s186 = sor.u32 %s184, %s185
      %s187 = ssub.s32 %s24, %s33
      %s188 = sor.u32 %s186, %s187
      %p189 = scmp.eq.s32.totalorder %s188, 0
      %s191 = sadd.s32 %s190, 1
      %s192 = scalar_select %p189, %s190, %s191
      %p195 = pneg %p189
      %p196 = scmp.eq.s32.totalorder %s15, 17
      %p197 = por %p195, %p196
      %p198 = scmp.ne.s32.totalorder %s190, %s193
      %p199 = scmp.eq.s32.totalorder %s15, 0
      %p200 = por %p198, %p199
      %p201 = scmp.ne.s32.totalorder %s190, %s193
      %p202 = scmp.eq.s32.totalorder %s20, 17
      %p203 = por %p201, %p202
      %p204 = scmp.ne.s32.totalorder %s193, %s194
      %p205 = scmp.eq.s32.totalorder %s20, 0
      %p206 = por %p204, %p205
      %p207 = scmp.ne.s32.totalorder %s193, %s194
      %p208 = scmp.eq.s32.totalorder %s21, 17
      %p209 = por %p207, %p208
      %p211 = scmp.ne.s32.totalorder %s194, %s210
      %p212 = scmp.eq.s32.totalorder %s21, 0
      %p213 = por %p211, %p212
      %p214 = scmp.le.s32.totalorder 1, %s15
      %p215 = scmp.lt.s32.totalorder %s15, 19
      %p216 = pnand %p214, %p215
      %p217 = pneg %p216
      // Predicated region
      $region9: #{_lambda_.3} parent=5 // pred_check
        _
      $region10: #{_lambda_.3} parent=5 // pred_check_branch
        %219 = sbr.rel (%p216) target = $region12
      $region11: #{_lambda_.3} parent=5 // pred_region
        %s220 = ssub.s32 %s15, 1
        // Predicated region
        $region13: #{_lambda_.3} parent=11 // pred_check
          %p221 = pneg %p85
        $region14: #{_lambda_.3} parent=11 // pred_check_branch
          %223 = sbr.rel (%p221) target = $region16
        $region15: #{_lambda_.3} parent=11 // pred_region
          _
        $region16: #{_lambda_.3} parent=11 // pred_fallthru
          _
        // Predicated region
        $region17: #{_lambda_.3} parent=11 // pred_check
          %p224 = pneg %p106
        $region18: #{_lambda_.3} parent=11 // pred_check_branch
          %226 = sbr.rel (%p224) target = $region20
        $region19: #{_lambda_.3} parent=11 // pred_region
          _
        $region20: #{_lambda_.3} parent=11 // pred_fallthru
          _
        // Predicated region
        $region21: #{_lambda_.3} parent=11 // pred_check
          %p227 = pneg %p127
        $region22: #{_lambda_.3} parent=11 // pred_check_branch
          %229 = sbr.rel (%p227) target = $region24
        $region23: #{_lambda_.3} parent=11 // pred_region
          _
        $region24: #{_lambda_.3} parent=11 // pred_fallthru
          _
        // Predicated region
        $region25: #{_lambda_.3} parent=11 // pred_check
          %p230 = pneg %p148
        $region26: #{_lambda_.3} parent=11 // pred_check_branch
          %232 = sbr.rel (%p230) target = $region28
        $region27: #{_lambda_.3} parent=11 // pred_region
          _
        $region28: #{_lambda_.3} parent=11 // pred_fallthru
          _
      $region12: #{_lambda_.3} parent=5 // pred_fallthru
        _
      %p233 = scmp.lt.s32.totalorder %s15, 18
      // Predicated region
      $region29: #{_lambda_.3} parent=5 // pred_check
        %p234 = pneg %p233
      $region30: #{_lambda_.3} parent=5 // pred_check_branch
        %236 = sbr.rel (%p234) target = $region32
      $region31: #{_lambda_.3} parent=5 // pred_region
        // Predicated region
        $region33: #{_lambda_.3} parent=31 // pred_check
          %p237 = pneg %p58
        $region34: #{_lambda_.3} parent=31 // pred_check_branch
          %239 = sbr.rel (%p237) target = $region36
        $region35: #{_lambda_.3} parent=31 // pred_region
          %s240 = smul.u32 2, %s24
          %p241 = scmp.lt.s32.totalorder %s22, 1
          %s242 = scalar_select %p241, %s22, 1
          %p243 = scmp.lt.s32.totalorder %s23, 11
          %s244 = scalar_select %p243, %s23, 11
          %p245 = scmp.lt.s32.totalorder %s240, 1
          %s246 = scalar_select %p245, %s240, 1
          %s247 = smul.addr %s244, 2
          %s248 = sadd.s32 %s246, %s247
          %s249 = smul.addr %s242, 24
          %s250 = sadd.s32 %s248, %s249
          %s251 = smul.addr %s250, 4
          %s252 = scalar_lea.vmem %s0, %s251
          %s253 = smul.u32 2, %s24
        $region36: #{_lambda_.3} parent=31 // pred_fallthru
          _
        // Predicated region
        $region37: #{_lambda_.3} parent=31 // pred_check
          %p254 = pneg %p170
        $region38: #{_lambda_.3} parent=31 // pred_check_branch
          %256 = sbr.rel (%p254) target = $region40
        $region39: #{_lambda_.3} parent=31 // pred_region
          %s257 = smul.u32 2, %s24
          %p258 = scmp.lt.s32.totalorder %s23, 8
          %s259 = scalar_select %p258, %s23, 8
          %p260 = scmp.lt.s32.totalorder %s257, 1
          %s261 = scalar_select %p260, %s257, 1
          %s262 = smul.addr %s259, 2
          %s263 = sadd.s32 %s261, %s262
          %s264 = smul.addr %s263, 8
          %s265 = scalar_lea.vmem %s5, %s264
          %s266 = smul.u32 2, %s24
        $region40: #{_lambda_.3} parent=31 // pred_fallthru
          _
      $region32: #{_lambda_.3} parent=5 // pred_fallthru
        _
      %p267 = scmp.le.s32.totalorder 1, %s15
      %p268 = scmp.lt.s32.totalorder %s15, 19
      %p269 = pnand %p267, %p268
      %p270 = pneg %p269
      // Predicated region
      $region41: #{_lambda_.3} parent=5 // pred_check
        _
      $region42: #{_lambda_.3} parent=5 // pred_check_branch
        %272 = sbr.rel (%p269) target = $region44
      $region43: #{_lambda_.3} parent=5 // pred_region
        %s273 = ssub.s32 %s15, 1
        %s274 = smul.u32 2, %s27
        %p275 = scmp.lt.s32.totalorder %s25, 1
        %s276 = scalar_select %p275, %s25, 1
        %p277 = scmp.lt.s32.totalorder %s26, 11
        %s278 = scalar_select %p277, %s26, 11
        %p279 = scmp.lt.s32.totalorder %s274, 1
        %s280 = scalar_select %p279, %s274, 1
        %s281 = smul.addr %s278, 2
        %s282 = sadd.s32 %s280, %s281
        %s283 = smul.addr %s276, 24
        %s284 = sadd.s32 %s282, %s283
        %s285 = smul.addr %s284, 4
        %s286 = scalar_lea.vmem %s0, %s285
        %p287 = pneg %p64
        %p288 = pneg %p61
        %p289 = pneg %p85
        %p290 = pneg %p82
        %p291 = pneg %p106
        %p292 = pneg %p103
        %p293 = pneg %p127
        %p294 = pneg %p124
        %p295 = pneg %p148
        %p296 = pneg %p145
        %s297 = smul.u32 2, %s27
        %p298 = scmp.lt.s32.totalorder %s26, 8
        %s299 = scalar_select %p298, %s26, 8
        %p300 = scmp.lt.s32.totalorder %s297, 1
        %s301 = scalar_select %p300, %s297, 1
        %s302 = smul.addr %s299, 2
        %s303 = sadd.s32 %s301, %s302
        %s304 = smul.addr %s303, 8
        %s305 = scalar_lea.vmem %s5, %s304
        %p306 = pneg %p176
        %p307 = pneg %p173
        %p308 = pneg %p206
        %p309 = pneg %p203
        %s310 = sand.u32 %s193, 1
        %s311 = scalar_lea.sflag [#allocation3], %s310
        %s312 = sand.u32 %s193, 1
        %s313 = smul.addr %s312, 8
        %s314 = scalar_lea.vmem [#allocation2], %s313
        %s315 = smul.u32 2, %s27
        %p316 = scmp.lt.s32.totalorder %s25, 1
        %s317 = scalar_select %p316, %s25, 1
        %p318 = scmp.lt.s32.totalorder %s26, 11
        %s319 = scalar_select %p318, %s26, 11
        %p320 = scmp.lt.s32.totalorder %s315, 1
        %s321 = scalar_select %p320, %s315, 1
        %s322 = smul.addr %s319, 2
        %s323 = sadd.s32 %s321, %s322
        %s324 = smul.addr %s317, 24
        %s325 = sadd.s32 %s323, %s324
        %s326 = smul.addr %s325, 4
        %s327 = scalar_lea.vmem %s0, %s326
        %s328 = smul.u32 2, %s27
        %s329 = smul.u32 2, %s27
        %p330 = scmp.lt.s32.totalorder %s26, 8
        %s331 = scalar_select %p330, %s26, 8
        %p332 = scmp.lt.s32.totalorder %s329, 1
        %s333 = scalar_select %p332, %s329, 1
        %s334 = smul.addr %s331, 2
        %s335 = sadd.s32 %s333, %s334
        %s336 = smul.addr %s335, 8
        %s337 = scalar_lea.vmem %s5, %s336
        %s338 = smul.u32 2, %s27
        %s339 = smul.u32 2, %s27
        %v341 = vld [vmem:[%s327] sm:$0xf]
        %v342 = vld [vmem:[%s327 + $0x4] sm:$0xf]
        %v343 = vld [vmem:[%s1] sm:$0xf]
        %v344 = vld [vmem:[%s1 + $0x4] sm:$0xf]
        %v345 = vld [vmem:[%s1 + $0x8] sm:$0xf]
        %v346 = vld [vmem:[%s1 + $0xc] sm:$0xf]
        %v347 = vld [vmem:[%s1 + $0x10] sm:$0xf]
        %v348 = vld [vmem:[%s1 + $0x14] sm:$0xf]
        %v349 = vld [vmem:[%s1 + $0x18] sm:$0xf]
        %v350 = vld [vmem:[%s1 + $0x1c] sm:$0xf]
        %v351 = vld [vmem:[%s2] sm:$0x1]
        %v353 = vperm.slane %v351, 0
        %v357 = vunpack.c.l.b16 %v341
        %v358 = vunpack.c.l.b16 %v342
        %v359 = vpack.c.b16 %v358, %v357
        %v368 = vunpack.c.l.b16 %v343
        %v369 = vunpack.c.l.b16 %v344
        %v370 = vunpack.c.l.b16 %v345
        %v371 = vunpack.c.l.b16 %v346
        %v372 = vunpack.c.l.b16 %v347
        %v373 = vunpack.c.l.b16 %v348
        %v374 = vunpack.c.l.b16 %v349
        %v375 = vunpack.c.l.b16 %v350
        %v376 = vpack.c.b16 %v369, %v368
        %v377 = vpack.c.b16 %v371, %v370
        %v378 = vpack.c.b16 %v373, %v372
        %v379 = vpack.c.b16 %v375, %v374
        %vm384 = vcmask 523264
        %v386 = vsel %vm384, %v359, 0
        %388 = vmatpush.bf16.msra.mxu0 0
        %389 = vmatpush.bf16.msra.mxu0 0
        %390 = vmatpush.bf16.msra.mxu0 0
        %391 = vmatpush.bf16.msra.mxu0 0
        %392 = vmatpush.bf16.msra.mxu0 %v379
        %393 = vmatpush.bf16.msra.mxu0 %v378
        %394 = vmatpush.bf16.msra.mxu0 %v377
        %395 = vmatpush.bf16.msra.mxu0 %v376
        %396 = vmatmul.bf16.gmra.mxu0 %v386
        %v397 = vpop.f32.mrf.mxu0
        %v398 = vadd.f32 %v353, %v397
        %v399 = vpop.f32.mrf.mxu0
        %v400 = vadd.f32 %v353, %v399
        %401 = vdwg.mxu0
        %402 = vadd.xlane.f32.xlu0 %v398
        %v403 = vpop.xlane.xlu0 %402
        %404 = vadd.xlane.f32.xlu0 %v400
        %v405 = vpop.xlane.xlu0 %404
        %v406 = vrcp.pop 128.0
        %v407 = vmul.f32 128.0, %v406
        %v408 = vsub.f32 1.0, %v407
        %v409 = vmul.f32 %v406, %v408
        %v410 = vadd.f32 %v406, %v409
        %vm411 = vweird.f32 %v406
        %v412 = vsel %vm411, %v406, %v410
        %v413 = vmul.f32 %v403, %v412
        %v414 = vmul.f32 %v405, %v412
        %v415 = vsub.f32 %v398, %v413
        %v416 = vsub.f32 %v400, %v414
        %v417 = vmul.f32 %v415, %v415
        %v418 = vmul.f32 %v416, %v416
        %419 = vadd.xlane.f32.xlu0 %v417
        %v420 = vpop.xlane.xlu0 %419
        %421 = vadd.xlane.f32.xlu0 %v418
        %v422 = vpop.xlane.xlu0 %421
        %v423 = vmul.f32 %v420, %v412
        %v424 = vmul.f32 %v422, %v412
        %v425 = vld [vmem:[%s3] sm:$0x1]
        %v426 = vadd.f32 %v423, 1e-05
        %v427 = vadd.f32 %v424, 1e-05
        %v428 = vrsqrt.pop %v426
        %v429 = vmul.f32 %v428, %v426
        %v430 = vmul.f32 %v429, %v428
        %v431 = vmul.f32 0.5, %v430
        %v432 = vsub.f32 1.5, %v431
        %v433 = vmul.f32 %v428, %v432
        %vm434 = vweird.f32 %v426
        %vm435 = vweird.f32 %v428
        %vm436 = vmor %vm434, %vm435
        %v437 = vsel %vm436, %v428, %v433
        %v438 = vrsqrt.pop %v427
        %v439 = vmul.f32 %v438, %v427
        %v440 = vmul.f32 %v439, %v438
        %v441 = vmul.f32 0.5, %v440
        %v442 = vsub.f32 1.5, %v441
        %v443 = vmul.f32 %v438, %v442
        %vm444 = vweird.f32 %v427
        %vm445 = vweird.f32 %v438
        %vm446 = vmor %vm444, %vm445
        %v447 = vsel %vm446, %v438, %v443
        %v449 = vperm.slane %v425, 0
        %v451 = vmul.f32 %v449, %v437
        %v452 = vmul.f32 %v449, %v447
        %v453 = vmul.f32 %v415, %v451
        %v454 = vmul.f32 %v416, %v452
        %v455 = vld [vmem:[%s4] sm:$0x1]
        %v456 = vld [vmem:[%s337] sm:$0xff]
        %v457 = vld [vmem:[%s337 + $0x8] sm:$0xff]
        %v459 = vperm.slane %v455, 0
        %v461 = vadd.f32 %v459, %v456
        %v462 = vadd.f32 %v459, %v457
        %v463 = vadd.f32 %v453, %v461
        %v464 = vadd.f32 %v454, %v462
        %v465 = vpack.c.bf16 %v463, %v463
        %v466 = vpack.c.bf16 %v464, %v464
        %467 = vst [vmem:[%s314] sm:$0xf] %v465
        %468 = vst [vmem:[%s314 + $0x4] sm:$0xf] %v466
        %s469 = sand.u32 %s193, 1
        %s470 = scalar_lea.sflag [#allocation3], %s469
        %s471 = sand.u32 %s193, 1
        %s472 = smul.addr %s471, 8
        %s473 = scalar_lea.vmem [#allocation2], %s472
        // Predicated region
        $region45: #{_lambda_.3} parent=43 // pred_check
          %p474 = pneg %p203
        $region46: #{_lambda_.3} parent=43 // pred_check_branch
          %476 = sbr.rel (%p474) target = $region48
        $region47: #{_lambda_.3} parent=43 // pred_region
          %s477 = smul.u32 2, %s27
          %479 = vsyncadd %s470, 0
          %s480 = smul.addr %s26, 2
          %s481 = sadd.s32 %s477, %s480
          %s482 = smul.addr %s25, 18
          %s483 = sadd.s32 %s481, %s482
          %s484 = smul.addr %s483, 4
          %s485 = scalar_lea.hbm %s6, %s484
          %s486 = sshll.u32 %s473, 4
          %s487 = int_to_ptr.vmem [resolvable:$true] %s486
          %s488 = sshll.u32 %s485, 4
          %s489 = int_to_ptr.hbm [resolvable:$true] %s488
          %494 = dma.vmem_to_hbm [thread:$0]  %s487, 128, %s489, %s470, 64, 64, 4
        $region48: #{_lambda_.3} parent=43 // pred_fallthru
          _
      $region44: #{_lambda_.3} parent=5 // pred_fallthru
        _
      %p495 = scmp.le.s32.totalorder 2, %s15
      // Predicated region
      $region49: #{_lambda_.3} parent=5 // pred_check
        %p496 = pneg %p495
      $region50: #{_lambda_.3} parent=5 // pred_check_branch
        %498 = sbr.rel (%p496) target = $region52
      $region51: #{_lambda_.3} parent=5 // pred_region
        %s499 = ssub.s32 %s15, 2
        // Predicated region
        $region53: #{_lambda_.3} parent=51 // pred_check
          %p500 = pneg %p209
        $region54: #{_lambda_.3} parent=51 // pred_check_branch
          %502 = sbr.rel (%p500) target = $region56
        $region55: #{_lambda_.3} parent=51 // pred_region
          %s503 = sand.u32 %s194, 1
          %s504 = scalar_lea.sflag [#allocation3], %s503
          %s505 = sand.u32 %s194, 1
          %s506 = smul.addr %s505, 8
          %s507 = scalar_lea.vmem [#allocation2], %s506
          %509 = dma.done %s504, 128
        $region56: #{_lambda_.3} parent=51 // pred_fallthru
          _
      $region52: #{_lambda_.3} parent=5 // pred_fallthru
        _
    $region6: #{_lambda_.3} parent=1 // loop_footer
      %s19 = sadd.s32 1, %s15
    $region7: #{_lambda_.3} parent=1 // loop_footer_branch
      %14 = sbr.rel target = $region3
    $region8: #{_lambda_.3} parent=1 // loop_exit
      _
    %510 = vsyncpa [#allocation3], 1
    %s511 = scalar_lea.sflag [#allocation3], 1
    %512 = vsyncpa %s511, 1

// kernel: _lambda_.4
$region0: #{_lambda_.4}
  #allocation0 [shape = 'u32[]', space=smem, size = 0x4, offset = 0x4, fixed_abs, tag = 'smem constant byte address 0x4 - core index']
  #allocation1 [shape = 'u32[72,128]{1,0:T(1,128)}', space=vmem, size = 0x9000, scoped, tag = 'internal scratch']
  %s0 = inlined_call_operand.vmem [shape: bf16[2,12,16,64], index: 0, kind: input, shape index: {}]
  %s1 = inlined_call_operand.vmem [shape: bf16[2,64,128], index: 1, kind: input, shape index: {}]
  %s2 = inlined_call_operand.vmem [shape: f32[1,128], index: 2, kind: input, shape index: {}]
  %s3 = inlined_call_operand.vmem [shape: f32[1,128], index: 3, kind: input, shape index: {}]
  %s4 = inlined_call_operand.vmem [shape: f32[1,128], index: 4, kind: input, shape index: {}]
  %s5 = inlined_call_operand.vmem [shape: f32[9,16,128], index: 5, kind: input, shape index: {}]
  %s6 = inlined_call_operand.hbm [shape: bf16[2,5,16,128], index: 6, kind: output, shape index: {}]
  %s7 = sld [smem:[#allocation0]]
  $region57: #{_lambda_.4} parent=0
    _
  %s9 = ssub.s32 1, %s7
  %s10 = scalar_select 0, %s9, %s7
  $region1: #{_lambda_.4} parent=0
    #allocation2 [shape = 'u8[8192]{0}', space=vmem, size = 0x2000, scoped, tag = 'output window, operand 0']
    #allocation3 [shape = 's32[2]{0}', space=sflag, size = 0x8, scoped, tag = 'scoped memory for _lambda_.4']
    %11 = vsyncpa [#allocation3], 0
    %s12 = scalar_lea.sflag [#allocation3], 1
    %13 = vsyncpa %s12, 0
    loop: start=0, step=1, limit=12
    $region2: #{_lambda_.4} parent=1 // loop_pre_header
      _
    $region3: #{_lambda_.4} parent=1 // loop_header
      %s15 = sphi 0, %s19
      %p16 = scmp.ge.s32.totalorder %s15, 12
      %s22 = sphi 0, %s41
      %s23 = sphi 0, %s37
      %s24 = sphi 0, %s33
      %s25 = sphi 0, %s22
      %s26 = sphi 0, %s23
      %s27 = sphi 0, %s24
      %s28 = sphi 0, %s25
      %s29 = sphi 0, %s26
      %s30 = sphi 0, %s27
      %s48 = sphi 0, %s50
      %s51 = sphi 0, %s48
      %s52 = sphi 0, %s51
      %s68 = sphi 0, %s52
      %s72 = sphi 0, %s72
      %s74 = sphi 0, %s72
      %s75 = sphi 0, %s74
      %s89 = sphi 0, %s75
      %s93 = sphi 0, %s93
      %s95 = sphi 0, %s93
      %s96 = sphi 0, %s95
      %s110 = sphi 0, %s96
      %s114 = sphi 0, %s114
      %s116 = sphi 0, %s114
      %s117 = sphi 0, %s116
      %s131 = sphi 0, %s117
      %s135 = sphi 0, %s135
      %s137 = sphi 0, %s135
      %s138 = sphi 0, %s137
      %s152 = sphi 0, %s138
      %s160 = sphi 0, %s162
      %s163 = sphi 0, %s160
      %s164 = sphi 0, %s163
      %s180 = sphi 0, %s164
      %s190 = sphi 0, %s192
      %s193 = sphi 0, %s190
      %s194 = sphi 0, %s193
      %s210 = sphi 0, %s194
    $region4: #{_lambda_.4} parent=1 // loop_header_branch
      %18 = sbr.rel (%p16) target = $region8
    $region5: #{_lambda_.4} parent=1 // loop_body
      %s20 = ssub.s32 %s15, 1
      %s21 = ssub.s32 %s15, 2
      %s31 = sadd.s32 1, %s24
      %p32 = scmp.ge.s32.totalorder %s31, 1
      %s33 = scalar_select %p32, 0, %s31
      %s34 = sadd.s32 1, %s23
      %s35 = scalar_select %p32, %s34, %s23
      %p36 = scmp.ge.s32.totalorder %s35, 5
      %s37 = scalar_select %p36, 0, %s35
      %s38 = sadd.s32 1, %s22
      %s39 = scalar_select %p36, %s38, %s22
      %p40 = scmp.ge.s32.totalorder %s39, 2
      %s41 = scalar_select %p40, 0, %s39
      %s42 = ssub.s32 %s22, %s41
      %s43 = ssub.s32 %s23, %s37
      %s44 = sor.u32 %s42, %s43
      %s45 = ssub.s32 %s24, %s33
      %s46 = sor.u32 %s44, %s45
      %p47 = scmp.eq.s32.totalorder %s46, 0
      %s49 = sadd.s32 %s48, 1
      %s50 = scalar_select %p47, %s48, %s49
      %p53 = pneg %p47
      %p54 = scmp.eq.s32.totalorder %s15, 9
      %p55 = por %p53, %p54
      %p56 = scmp.ne.s32.totalorder %s48, %s51
      %p57 = scmp.eq.s32.totalorder %s15, 0
      %p58 = por %p56, %p57
      %p59 = scmp.ne.s32.totalorder %s48, %s51
      %p60 = scmp.eq.s32.totalorder %s20, 9
      %p61 = por %p59, %p60
      %p62 = scmp.ne.s32.totalorder %s51, %s52
      %p63 = scmp.eq.s32.totalorder %s20, 0
      %p64 = por %p62, %p63
      %p65 = scmp.ne.s32.totalorder %s51, %s52
      %p66 = scmp.eq.s32.totalorder %s21, 9
      %p67 = por %p65, %p66
      %p69 = scmp.ne.s32.totalorder %s52, %s68
      %p70 = scmp.eq.s32.totalorder %s21, 0
      %p71 = por %p69, %p70
      %s73 = sadd.s32 %s72, 1
      %p76 = scmp.eq.s32.totalorder %s15, 9
      %p77 = scmp.ne.s32.totalorder %s72, %s74
      %p78 = scmp.eq.s32.totalorder %s15, 0
      %p79 = por %p77, %p78
      %p80 = scmp.ne.s32.totalorder %s72, %s74
      %p81 = scmp.eq.s32.totalorder %s20, 9
      %p82 = por %p80, %p81
      %p83 = scmp.ne.s32.totalorder %s74, %s75
      %p84 = scmp.eq.s32.totalorder %s20, 0
      %p85 = por %p83, %p84
      %p86 = scmp.ne.s32.totalorder %s74, %s75
      %p87 = scmp.eq.s32.totalorder %s21, 9
      %p88 = por %p86, %p87
      %p90 = scmp.ne.s32.totalorder %s75, %s89
      %p91 = scmp.eq.s32.totalorder %s21, 0
      %p92 = por %p90, %p91
      %s94 = sadd.s32 %s93, 1
      %p97 = scmp.eq.s32.totalorder %s15, 9
      %p98 = scmp.ne.s32.totalorder %s93, %s95
      %p99 = scmp.eq.s32.totalorder %s15, 0
      %p100 = por %p98, %p99
      %p101 = scmp.ne.s32.totalorder %s93, %s95
      %p102 = scmp.eq.s32.totalorder %s20, 9
      %p103 = por %p101, %p102
      %p104 = scmp.ne.s32.totalorder %s95, %s96
      %p105 = scmp.eq.s32.totalorder %s20, 0
      %p106 = por %p104, %p105
      %p107 = scmp.ne.s32.totalorder %s95, %s96
      %p108 = scmp.eq.s32.totalorder %s21, 9
      %p109 = por %p107, %p108
      %p111 = scmp.ne.s32.totalorder %s96, %s110
      %p112 = scmp.eq.s32.totalorder %s21, 0
      %p113 = por %p111, %p112
      %s115 = sadd.s32 %s114, 1
      %p118 = scmp.eq.s32.totalorder %s15, 9
      %p119 = scmp.ne.s32.totalorder %s114, %s116
      %p120 = scmp.eq.s32.totalorder %s15, 0
      %p121 = por %p119, %p120
      %p122 = scmp.ne.s32.totalorder %s114, %s116
      %p123 = scmp.eq.s32.totalorder %s20, 9
      %p124 = por %p122, %p123
      %p125 = scmp.ne.s32.totalorder %s116, %s117
      %p126 = scmp.eq.s32.totalorder %s20, 0
      %p127 = por %p125, %p126
      %p128 = scmp.ne.s32.totalorder %s116, %s117
      %p129 = scmp.eq.s32.totalorder %s21, 9
      %p130 = por %p128, %p129
      %p132 = scmp.ne.s32.totalorder %s117, %s131
      %p133 = scmp.eq.s32.totalorder %s21, 0
      %p134 = por %p132, %p133
      %s136 = sadd.s32 %s135, 1
      %p139 = scmp.eq.s32.totalorder %s15, 9
      %p140 = scmp.ne.s32.totalorder %s135, %s137
      %p141 = scmp.eq.s32.totalorder %s15, 0
      %p142 = por %p140, %p141
      %p143 = scmp.ne.s32.totalorder %s135, %s137
      %p144 = scmp.eq.s32.totalorder %s20, 9
      %p145 = por %p143, %p144
      %p146 = scmp.ne.s32.totalorder %s137, %s138
      %p147 = scmp.eq.s32.totalorder %s20, 0
      %p148 = por %p146, %p147
      %p149 = scmp.ne.s32.totalorder %s137, %s138
      %p150 = scmp.eq.s32.totalorder %s21, 9
      %p151 = por %p149, %p150
      %p153 = scmp.ne.s32.totalorder %s138, %s152
      %p154 = scmp.eq.s32.totalorder %s21, 0
      %p155 = por %p153, %p154
      %s156 = ssub.s32 %s23, %s37
      %s157 = ssub.s32 %s24, %s33
      %s158 = sor.u32 %s156, %s157
      %p159 = scmp.eq.s32.totalorder %s158, 0
      %s161 = sadd.s32 %s160, 1
      %s162 = scalar_select %p159, %s160, %s161
      %p165 = pneg %p159
      %p166 = scmp.eq.s32.totalorder %s15, 9
      %p167 = por %p165, %p166
      %p168 = scmp.ne.s32.totalorder %s160, %s163
      %p169 = scmp.eq.s32.totalorder %s15, 0
      %p170 = por %p168, %p169
      %p171 = scmp.ne.s32.totalorder %s160, %s163
      %p172 = scmp.eq.s32.totalorder %s20, 9
      %p173 = por %p171, %p172
      %p174 = scmp.ne.s32.totalorder %s163, %s164
      %p175 = scmp.eq.s32.totalorder %s20, 0
      %p176 = por %p174, %p175
      %p177 = scmp.ne.s32.totalorder %s163, %s164
      %p178 = scmp.eq.s32.totalorder %s21, 9
      %p179 = por %p177, %p178
      %p181 = scmp.ne.s32.totalorder %s164, %s180
      %p182 = scmp.eq.s32.totalorder %s21, 0
      %p183 = por %p181, %p182
      %s184 = ssub.s32 %s22, %s41
      %s185 = ssub.s32 %s23, %s37
      %s186 = sor.u32 %s184, %s185
      %s187 = ssub.s32 %s24, %s33
      %s188 = sor.u32 %s186, %s187
      %p189 = scmp.eq.s32.totalorder %s188, 0
      %s191 = sadd.s32 %s190, 1
      %s192 = scalar_select %p189, %s190, %s191
      %p195 = pneg %p189
      %p196 = scmp.eq.s32.totalorder %s15, 9
      %p197 = por %p195, %p196
      %p198 = scmp.ne.s32.totalorder %s190, %s193
      %p199 = scmp.eq.s32.totalorder %s15, 0
      %p200 = por %p198, %p199
      %p201 = scmp.ne.s32.totalorder %s190, %s193
      %p202 = scmp.eq.s32.totalorder %s20, 9
      %p203 = por %p201, %p202
      %p204 = scmp.ne.s32.totalorder %s193, %s194
      %p205 = scmp.eq.s32.totalorder %s20, 0
      %p206 = por %p204, %p205
      %p207 = scmp.ne.s32.totalorder %s193, %s194
      %p208 = scmp.eq.s32.totalorder %s21, 9
      %p209 = por %p207, %p208
      %p211 = scmp.ne.s32.totalorder %s194, %s210
      %p212 = scmp.eq.s32.totalorder %s21, 0
      %p213 = por %p211, %p212
      %p214 = scmp.le.s32.totalorder 1, %s15
      %p215 = scmp.lt.s32.totalorder %s15, 11
      %p216 = pnand %p214, %p215
      %p217 = pneg %p216
      // Predicated region
      $region9: #{_lambda_.4} parent=5 // pred_check
        _
      $region10: #{_lambda_.4} parent=5 // pred_check_branch
        %219 = sbr.rel (%p216) target = $region12
      $region11: #{_lambda_.4} parent=5 // pred_region
        %s220 = ssub.s32 %s15, 1
        // Predicated region
        $region13: #{_lambda_.4} parent=11 // pred_check
          %p221 = pneg %p85
        $region14: #{_lambda_.4} parent=11 // pred_check_branch
          %223 = sbr.rel (%p221) target = $region16
        $region15: #{_lambda_.4} parent=11 // pred_region
          _
        $region16: #{_lambda_.4} parent=11 // pred_fallthru
          _
        // Predicated region
        $region17: #{_lambda_.4} parent=11 // pred_check
          %p224 = pneg %p106
        $region18: #{_lambda_.4} parent=11 // pred_check_branch
          %226 = sbr.rel (%p224) target = $region20
        $region19: #{_lambda_.4} parent=11 // pred_region
          _
        $region20: #{_lambda_.4} parent=11 // pred_fallthru
          _
        // Predicated region
        $region21: #{_lambda_.4} parent=11 // pred_check
          %p227 = pneg %p127
        $region22: #{_lambda_.4} parent=11 // pred_check_branch
          %229 = sbr.rel (%p227) target = $region24
        $region23: #{_lambda_.4} parent=11 // pred_region
          _
        $region24: #{_lambda_.4} parent=11 // pred_fallthru
          _
        // Predicated region
        $region25: #{_lambda_.4} parent=11 // pred_check
          %p230 = pneg %p148
        $region26: #{_lambda_.4} parent=11 // pred_check_branch
          %232 = sbr.rel (%p230) target = $region28
        $region27: #{_lambda_.4} parent=11 // pred_region
          _
        $region28: #{_lambda_.4} parent=11 // pred_fallthru
          _
      $region12: #{_lambda_.4} parent=5 // pred_fallthru
        _
      %p233 = scmp.lt.s32.totalorder %s15, 10
      // Predicated region
      $region29: #{_lambda_.4} parent=5 // pred_check
        %p234 = pneg %p233
      $region30: #{_lambda_.4} parent=5 // pred_check_branch
        %236 = sbr.rel (%p234) target = $region32
      $region31: #{_lambda_.4} parent=5 // pred_region
        // Predicated region
        $region33: #{_lambda_.4} parent=31 // pred_check
          %p237 = pneg %p58
        $region34: #{_lambda_.4} parent=31 // pred_check_branch
          %239 = sbr.rel (%p237) target = $region36
        $region35: #{_lambda_.4} parent=31 // pred_region
          %s240 = smul.u32 2, %s23
          %s241 = smul.u32 2, %s24
          %p242 = scmp.lt.s32.totalorder %s22, 1
          %s243 = scalar_select %p242, %s22, 1
          %p244 = scmp.lt.s32.totalorder %s240, 11
          %s245 = scalar_select %p244, %s240, 11
          %p246 = scmp.lt.s32.totalorder %s241, 1
          %s247 = scalar_select %p246, %s241, 1
          %s248 = smul.addr %s245, 2
          %s249 = sadd.s32 %s247, %s248
          %s250 = smul.addr %s243, 24
          %s251 = sadd.s32 %s249, %s250
          %s252 = smul.addr %s251, 4
          %s253 = scalar_lea.vmem %s0, %s252
          %s254 = smul.u32 2, %s23
          %s255 = smul.u32 2, %s24
        $region36: #{_lambda_.4} parent=31 // pred_fallthru
          _
        // Predicated region
        $region37: #{_lambda_.4} parent=31 // pred_check
          %p256 = pneg %p170
        $region38: #{_lambda_.4} parent=31 // pred_check_branch
          %258 = sbr.rel (%p256) target = $region40
        $region39: #{_lambda_.4} parent=31 // pred_region
          %s259 = smul.u32 2, %s24
          %p260 = scmp.lt.s32.totalorder %s23, 8
          %s261 = scalar_select %p260, %s23, 8
          %p262 = scmp.lt.s32.totalorder %s259, 1
          %s263 = scalar_select %p262, %s259, 1
          %s264 = smul.addr %s261, 2
          %s265 = sadd.s32 %s263, %s264
          %s266 = smul.addr %s265, 8
          %s267 = scalar_lea.vmem %s5, %s266
          %s268 = smul.u32 2, %s24
        $region40: #{_lambda_.4} parent=31 // pred_fallthru
          _
      $region32: #{_lambda_.4} parent=5 // pred_fallthru
        _
      %p269 = scmp.le.s32.totalorder 1, %s15
      %p270 = scmp.lt.s32.totalorder %s15, 11
      %p271 = pnand %p269, %p270
      %p272 = pneg %p271
      // Predicated region
      $region41: #{_lambda_.4} parent=5 // pred_check
        _
      $region42: #{_lambda_.4} parent=5 // pred_check_branch
        %274 = sbr.rel (%p271) target = $region44
      $region43: #{_lambda_.4} parent=5 // pred_region
        %s275 = ssub.s32 %s15, 1
        %s276 = smul.u32 2, %s26
        %s277 = smul.u32 2, %s27
        %p278 = scmp.lt.s32.totalorder %s25, 1
        %s279 = scalar_select %p278, %s25, 1
        %p280 = scmp.lt.s32.totalorder %s276, 11
        %s281 = scalar_select %p280, %s276, 11
        %p282 = scmp.lt.s32.totalorder %s277, 1
        %s283 = scalar_select %p282, %s277, 1
        %s284 = smul.addr %s281, 2
        %s285 = sadd.s32 %s283, %s284
        %s286 = smul.addr %s279, 24
        %s287 = sadd.s32 %s285, %s286
        %s288 = smul.addr %s287, 4
        %s289 = scalar_lea.vmem %s0, %s288
        %p290 = pneg %p64
        %p291 = pneg %p61
        %p292 = pneg %p85
        %p293 = pneg %p82
        %p294 = pneg %p106
        %p295 = pneg %p103
        %p296 = pneg %p127
        %p297 = pneg %p124
        %p298 = pneg %p148
        %p299 = pneg %p145
        %s300 = smul.u32 2, %s27
        %p301 = scmp.lt.s32.totalorder %s26, 8
        %s302 = scalar_select %p301, %s26, 8
        %p303 = scmp.lt.s32.totalorder %s300, 1
        %s304 = scalar_select %p303, %s300, 1
        %s305 = smul.addr %s302, 2
        %s306 = sadd.s32 %s304, %s305
        %s307 = smul.addr %s306, 8
        %s308 = scalar_lea.vmem %s5, %s307
        %p309 = pneg %p176
        %p310 = pneg %p173
        %p311 = pneg %p206
        %p312 = pneg %p203
        %s313 = sand.u32 %s193, 1
        %s314 = scalar_lea.sflag [#allocation3], %s313
        %s315 = sand.u32 %s193, 1
        %s316 = smul.addr %s315, 8
        %s317 = scalar_lea.vmem [#allocation2], %s316
        %s318 = smul.u32 2, %s26
        %s319 = smul.u32 2, %s27
        %p320 = scmp.lt.s32.totalorder %s25, 1
        %s321 = scalar_select %p320, %s25, 1
        %p322 = scmp.lt.s32.totalorder %s318, 11
        %s323 = scalar_select %p322, %s318, 11
        %p324 = scmp.lt.s32.totalorder %s319, 1
        %s325 = scalar_select %p324, %s319, 1
        %s326 = smul.addr %s323, 2
        %s327 = sadd.s32 %s325, %s326
        %s328 = smul.addr %s321, 24
        %s329 = sadd.s32 %s327, %s328
        %s330 = smul.addr %s329, 4
        %s331 = scalar_lea.vmem %s0, %s330
        %s332 = smul.u32 2, %s26
        %s333 = smul.u32 2, %s27
        %s334 = smul.u32 2, %s27
        %p335 = scmp.lt.s32.totalorder %s26, 8
        %s336 = scalar_select %p335, %s26, 8
        %p337 = scmp.lt.s32.totalorder %s334, 1
        %s338 = scalar_select %p337, %s334, 1
        %s339 = smul.addr %s336, 2
        %s340 = sadd.s32 %s338, %s339
        %s341 = smul.addr %s340, 8
        %s342 = scalar_lea.vmem %s5, %s341
        %s343 = smul.u32 2, %s27
        %s344 = smul.u32 2, %s27
        %v346 = vld [vmem:[%s331] sm:$0xf]
        %v347 = vld [vmem:[%s331 + $0x4] sm:$0xf]
        %v348 = vld [vmem:[%s1] sm:$0xf]
        %v349 = vld [vmem:[%s1 + $0x4] sm:$0xf]
        %v350 = vld [vmem:[%s1 + $0x8] sm:$0xf]
        %v351 = vld [vmem:[%s1 + $0xc] sm:$0xf]
        %v352 = vld [vmem:[%s1 + $0x10] sm:$0xf]
        %v353 = vld [vmem:[%s1 + $0x14] sm:$0xf]
        %v354 = vld [vmem:[%s1 + $0x18] sm:$0xf]
        %v355 = vld [vmem:[%s1 + $0x1c] sm:$0xf]
        %s356 = scalar_lea.vmem %s331, 8
        %v357 = vld [vmem:[%s356] sm:$0xf]
        %v358 = vld [vmem:[%s356 + $0x4] sm:$0xf]
        %s359 = scalar_lea.vmem %s1, 32
        %v360 = vld [vmem:[%s359] sm:$0xf]
        %v361 = vld [vmem:[%s359 + $0x4] sm:$0xf]
        %v362 = vld [vmem:[%s359 + $0x8] sm:$0xf]
        %v363 = vld [vmem:[%s359 + $0xc] sm:$0xf]
        %v364 = vld [vmem:[%s359 + $0x10] sm:$0xf]
        %v365 = vld [vmem:[%s359 + $0x14] sm:$0xf]
        %v366 = vld [vmem:[%s359 + $0x18] sm:$0xf]
        %v367 = vld [vmem:[%s359 + $0x1c] sm:$0xf]
        %v370 = vunpack.c.l.b16 %v357
        %v371 = vunpack.c.l.b16 %v358
        %v372 = vpack.c.b16 %v371, %v370
        %v381 = vunpack.c.l.b16 %v360
        %v382 = vunpack.c.l.b16 %v361
        %v383 = vunpack.c.l.b16 %v362
        %v384 = vunpack.c.l.b16 %v363
        %v385 = vunpack.c.l.b16 %v364
        %v386 = vunpack.c.l.b16 %v365
        %v387 = vunpack.c.l.b16 %v366
        %v388 = vunpack.c.l.b16 %v367
        %v389 = vpack.c.b16 %v382, %v381
        %v390 = vpack.c.b16 %v384, %v383
        %v391 = vpack.c.b16 %v386, %v385
        %v392 = vpack.c.b16 %v388, %v387
        %vm397 = vcmask 523264
        %v399 = vsel %vm397, %v372, 0
        %401 = vmatpush.bf16.msra.mxu0 0
        %402 = vmatpush.bf16.msra.mxu0 0
        %403 = vmatpush.bf16.msra.mxu0 0
        %404 = vmatpush.bf16.msra.mxu0 0
        %405 = vmatpush.bf16.msra.mxu0 %v392
        %406 = vmatpush.bf16.msra.mxu0 %v391
        %407 = vmatpush.bf16.msra.mxu0 %v390
        %408 = vmatpush.bf16.msra.mxu0 %v389
        %409 = vmatmul.bf16.gmra.mxu0 %v399
        %v410 = vpop.f32.mrf.mxu0
        %v411 = vadd.f32 0.0, %v410
        %v412 = vpop.f32.mrf.mxu0
        %v413 = vadd.f32 0.0, %v412
        %414 = vdwg.mxu0
        %v417 = vunpack.c.l.b16 %v346
        %v418 = vunpack.c.l.b16 %v347
        %v419 = vpack.c.b16 %v418, %v417
        %v428 = vunpack.c.l.b16 %v348
        %v429 = vunpack.c.l.b16 %v349
        %v430 = vunpack.c.l.b16 %v350
        %v431 = vunpack.c.l.b16 %v351
        %v432 = vunpack.c.l.b16 %v352
        %v433 = vunpack.c.l.b16 %v353
        %v434 = vunpack.c.l.b16 %v354
        %v435 = vunpack.c.l.b16 %v355
        %v436 = vpack.c.b16 %v429, %v428
        %v437 = vpack.c.b16 %v431, %v430
        %v438 = vpack.c.b16 %v433, %v432
        %v439 = vpack.c.b16 %v435, %v434
        %v445 = vsel %vm397, %v419, 0
        %447 = vmatpush.bf16.msra.mxu0 0
        %448 = vmatpush.bf16.msra.mxu0 0
        %449 = vmatpush.bf16.msra.mxu0 0
        %450 = vmatpush.bf16.msra.mxu0 0
        %451 = vmatpush.bf16.msra.mxu0 %v439
        %452 = vmatpush.bf16.msra.mxu0 %v438
        %453 = vmatpush.bf16.msra.mxu0 %v437
        %454 = vmatpush.bf16.msra.mxu0 %v436
        %455 = vmatmul.bf16.gmra.mxu0 %v445
        %v456 = vpop.f32.mrf.mxu0
        %v457 = vadd.f32 %v411, %v456
        %v458 = vpop.f32.mrf.mxu0
        %v459 = vadd.f32 %v413, %v458
        %460 = vdwg.mxu0
        %v461 = vld [vmem:[%s2] sm:$0x1]
        %v463 = vperm.slane %v461, 0
        %v465 = vadd.f32 %v457, %v463
        %v466 = vadd.f32 %v459, %v463
        %467 = vadd.xlane.f32.xlu0 %v465
        %v468 = vpop.xlane.xlu0 %467
        %469 = vadd.xlane.f32.xlu0 %v466
        %v470 = vpop.xlane.xlu0 %469
        %v471 = vrcp.pop 128.0
        %v472 = vmul.f32 128.0, %v471
        %v473 = vsub.f32 1.0, %v472
        %v474 = vmul.f32 %v471, %v473
        %v475 = vadd.f32 %v471, %v474
        %vm476 = vweird.f32 %v471
        %v477 = vsel %vm476, %v471, %v475
        %v478 = vmul.f32 %v468, %v477
        %v479 = vmul.f32 %v470, %v477
        %v480 = vsub.f32 %v465, %v478
        %v481 = vsub.f32 %v466, %v479
        %v482 = vmul.f32 %v480, %v480
        %v483 = vmul.f32 %v481, %v481
        %484 = vadd.xlane.f32.xlu0 %v482
        %v485 = vpop.xlane.xlu0 %484
        %486 = vadd.xlane.f32.xlu0 %v483
        %v487 = vpop.xlane.xlu0 %486
        %v488 = vmul.f32 %v485, %v477
        %v489 = vmul.f32 %v487, %v477
        %v490 = vld [vmem:[%s3] sm:$0x1]
        %v491 = vadd.f32 %v488, 1e-05
        %v492 = vadd.f32 %v489, 1e-05
        %v493 = vrsqrt.pop %v491
        %v494 = vmul.f32 %v493, %v491
        %v495 = vmul.f32 %v494, %v493
        %v496 = vmul.f32 0.5, %v495
        %v497 = vsub.f32 1.5, %v496
        %v498 = vmul.f32 %v493, %v497
        %vm499 = vweird.f32 %v491
        %vm500 = vweird.f32 %v493
        %vm501 = vmor %vm499, %vm500
        %v502 = vsel %vm501, %v493, %v498
        %v503 = vrsqrt.pop %v492
        %v504 = vmul.f32 %v503, %v492
        %v505 = vmul.f32 %v504, %v503
        %v506 = vmul.f32 0.5, %v505
        %v507 = vsub.f32 1.5, %v506
        %v508 = vmul.f32 %v503, %v507
        %vm509 = vweird.f32 %v492
        %vm510 = vweird.f32 %v503
        %vm511 = vmor %vm509, %vm510
        %v512 = vsel %vm511, %v503, %v508
        %v514 = vperm.slane %v490, 0
        %v516 = vmul.f32 %v514, %v502
        %v517 = vmul.f32 %v514, %v512
        %v518 = vmul.f32 %v480, %v516
        %v519 = vmul.f32 %v481, %v517
        %v520 = vld [vmem:[%s4] sm:$0x1]
        %v521 = vld [vmem:[%s342] sm:$0xff]
        %v522 = vld [vmem:[%s342 + $0x8] sm:$0xff]
        %v524 = vperm.slane %v520, 0
        %v526 = vadd.f32 %v524, %v521
        %v527 = vadd.f32 %v524, %v522
        %v528 = vadd.f32 %v518, %v526
        %v529 = vadd.f32 %v519, %v527
        %v530 = vpack.c.bf16 %v528, %v528
        %v531 = vpack.c.bf16 %v529, %v529
        %532 = vst [vmem:[%s317] sm:$0xf] %v530
        %533 = vst [vmem:[%s317 + $0x4] sm:$0xf] %v531
        %s534 = sand.u32 %s193, 1
        %s535 = scalar_lea.sflag [#allocation3], %s534
        %s536 = sand.u32 %s193, 1
        %s537 = smul.addr %s536, 8
        %s538 = scalar_lea.vmem [#allocation2], %s537
        // Predicated region
        $region45: #{_lambda_.4} parent=43 // pred_check
          %p539 = pneg %p203
        $region46: #{_lambda_.4} parent=43 // pred_check_branch
          %541 = sbr.rel (%p539) target = $region48
        $region47: #{_lambda_.4} parent=43 // pred_region
          %s542 = smul.u32 2, %s27
          %544 = vsyncadd %s535, 0
          %s545 = smul.addr %s26, 2
          %s546 = sadd.s32 %s542, %s545
          %s547 = smul.addr %s25, 10
          %s548 = sadd.s32 %s546, %s547
          %s549 = smul.addr %s548, 4
          %s550 = scalar_lea.hbm %s6, %s549
          %s551 = sshll.u32 %s538, 4
          %s552 = int_to_ptr.vmem [resolvable:$true] %s551
          %s553 = sshll.u32 %s550, 4
          %s554 = int_to_ptr.hbm [resolvable:$true] %s553
          %559 = dma.vmem_to_hbm [thread:$0]  %s552, 128, %s554, %s535, 64, 64, 4
        $region48: #{_lambda_.4} parent=43 // pred_fallthru
          _
      $region44: #{_lambda_.4} parent=5 // pred_fallthru
        _
      %p560 = scmp.le.s32.totalorder 2, %s15
      // Predicated region
      $region49: #{_lambda_.4} parent=5 // pred_check
        %p561 = pneg %p560
      $region50: #{_lambda_.4} parent=5 // pred_check_branch
        %563 = sbr.rel (%p561) target = $region52
      $region51: #{_lambda_.4} parent=5 // pred_region
        %s564 = ssub.s32 %s15, 2
        // Predicated region
        $region53: #{_lambda_.4} parent=51 // pred_check
          %p565 = pneg %p209
        $region54: #{_lambda_.4} parent=51 // pred_check_branch
          %567 = sbr.rel (%p565) target = $region56
        $region55: #{_lambda_.4} parent=51 // pred_region
          %s568 = sand.u32 %s194, 1
          %s569 = scalar_lea.sflag [#allocation3], %s568
          %s570 = sand.u32 %s194, 1
          %s571 = smul.addr %s570, 8
          %s572 = scalar_lea.vmem [#allocation2], %s571
          %574 = dma.done %s569, 128
        $region56: #{_lambda_.4} parent=51 // pred_fallthru
          _
      $region52: #{_lambda_.4} parent=5 // pred_fallthru
        _
    $region6: #{_lambda_.4} parent=1 // loop_footer
      %s19 = sadd.s32 1, %s15
    $region7: #{_lambda_.4} parent=1 // loop_footer_branch
      %14 = sbr.rel target = $region3
    $region8: #{_lambda_.4} parent=1 // loop_exit
      _
    %575 = vsyncpa [#allocation3], 1
    %s576 = scalar_lea.sflag [#allocation3], 1
    %577 = vsyncpa %s576, 1

</llo_original>
